<compile_context>
chip_gen: v7x
topology: tpu7x:2x2x1
jax: 0.10.0
libtpu: 0.0.40
codegen_flags: <defaults>
</compile_context>

<pallas_src>
import math
import functools

import jax
import jax.numpy as jnp
from jax.experimental import pallas as pl
from jax.experimental.pallas import tpu as pltpu


def _round_up(x, m):
    return ((x + m - 1) // m) * m


# -----------------------------------------------------------------------------
# Pallas kernel: T timesteps of one LSTM layer per grid step.
# -----------------------------------------------------------------------------
def _lstm_block_kernel(gx_ref, whh_ref, h0_ref, c0_ref,        # inputs
                       out_ref, hN_ref, cN_ref,                # outputs
                       h_sc, c_sc,                             # VMEM scratch
                       *, t_block, seq_len, hidden_pad):
    """gx_ref:  (T, Bp, 4*Hp) precomputed x-projection (+bias), f32
       whh_ref: (Hp, 4*Hp)    recurrent weight, native dtype (resident)
       h0/c0:   (Bp, Hp)      initial states
       out_ref: (T, Bp, Hp)   per-step hidden outputs
       hN/cN:   (Bp, Hp)      final states (written on last grid step)
       h_sc/c_sc: (Bp, Hp) f32 carries across grid steps."""
    tb = pl.program_id(0)
    Hp = hidden_pad
    needs_mask = (seq_len % t_block) != 0

    # Load initial state on the first grid step; carry persists in VMEM scratch.
    @pl.when(tb == 0)
    def _():
        h_sc[...] = h0_ref[...].astype(jnp.float32)
        c_sc[...] = c0_ref[...].astype(jnp.float32)

    whh = whh_ref[...]            # native dtype; MXU accumulates in f32 below

    def step(j, carry):
        h, c = carry              # (Bp, Hp) f32
        # Recurrent matmul only: x-projection + bias already folded into gx.
        gates = gx_ref[j] + jnp.dot(h.astype(whh.dtype), whh,
                                    preferred_element_type=jnp.float32)
        # Gate-major padded layout -> each slice is a lane-aligned 128-multiple.
        i_g = jax.nn.sigmoid(gates[:, 0 * Hp:1 * Hp])
        f_g = jax.nn.sigmoid(gates[:, 1 * Hp:2 * Hp])
        g_g = jnp.tanh(gates[:, 2 * Hp:3 * Hp])
        o_g = jax.nn.sigmoid(gates[:, 3 * Hp:4 * Hp])
        c_new = f_g * c + i_g * g_g
        h_new = o_g * jnp.tanh(c_new)
        if needs_mask:
            # Padded trailing timesteps (seq padded up to a multiple of T) must
            # not advance the state.
            valid = (tb * t_block + j) < seq_len
            h_new = jnp.where(valid, h_new, h)
            c_new = jnp.where(valid, c_new, c)
        out_ref[j] = h_new.astype(out_ref.dtype)
        return (h_new, c_new)

    h_fin, c_fin = jax.lax.fori_loop(0, t_block, step,
                                     (h_sc[...], c_sc[...]), unroll=True)
    h_sc[...] = h_fin
    c_sc[...] = c_fin

    @pl.when(tb == pl.num_programs(0) - 1)
    def _():
        hN_ref[...] = h_fin.astype(hN_ref.dtype)
        cN_ref[...] = c_fin.astype(cN_ref.dtype)


# -----------------------------------------------------------------------------
# One layer over the full sequence: hoisted projection (XLA) + Pallas recurrence.
# -----------------------------------------------------------------------------
@functools.partial(jax.jit, static_argnames=("t_block",))
def _lstm_layer_forward(x, w_ih_p, w_hh_p, bias_p, h0_p, c0_p, *, t_block):
    """x: (S, Bp, In)  w_ih_p: (In, 4Hp)  w_hh_p: (Hp, 4Hp)  bias_p: (4Hp,)
       h0_p, c0_p: (Bp, Hp).  Returns (out (S, Bp, Hp) , hN, cN)."""
    S, Bp, _ = x.shape
    Hp, G4 = w_hh_p.shape
    out_dtype = x.dtype

    # Hoisted input projection: one big MXU-filling matmul instead of S tiny ones,
    # bias folded in once (no per-step broadcast+add inside the recurrence).
    gx = jnp.einsum("sbi,ig->sbg", x, w_ih_p,
                    preferred_element_type=jnp.float32)
    gx = gx + bias_p.astype(jnp.float32)[None, None, :]

    T = min(t_block, S)
    nb = pl.cdiv(S, T)
    Sp = nb * T
    if Sp != S:
        gx = jnp.pad(gx, ((0, Sp - S), (0, 0), (0, 0)))

    kernel = functools.partial(_lstm_block_kernel,
                               t_block=T, seq_len=S, hidden_pad=Hp)

    # Rough VMEM budget (double-buffered gx/out tiles + resident weight + states),
    # capped at 64 MiB so it is also valid on v7x.
    itemsize = jnp.dtype(out_dtype).itemsize
    est = (2 * T * Bp * G4 * 4
           + 2 * T * Bp * Hp * itemsize
           + Hp * G4 * jnp.dtype(w_hh_p.dtype).itemsize
           + 8 * Bp * Hp * 4)
    vmem_limit = int(min(max(2 * est, 16 * 2 ** 20), 64 * 2 ** 20))

    out_p, hN, cN = pl.pallas_call(
        kernel,
        out_shape=(
            jax.ShapeDtypeStruct((Sp, Bp, Hp), out_dtype),
            jax.ShapeDtypeStruct((Bp, Hp), out_dtype),
            jax.ShapeDtypeStruct((Bp, Hp), out_dtype),
        ),
        grid_spec=pltpu.PrefetchScalarGridSpec(
            num_scalar_prefetch=0,
            grid=(nb,),
            in_specs=[
                pl.BlockSpec((T, Bp, G4), lambda tb: (tb, 0, 0)),   # gx block
                pl.BlockSpec((Hp, G4), lambda tb: (0, 0)),          # W_hh (resident)
                pl.BlockSpec((Bp, Hp), lambda tb: (0, 0)),          # h0
                pl.BlockSpec((Bp, Hp), lambda tb: (0, 0)),          # c0
            ],
            out_specs=[
                pl.BlockSpec((T, Bp, Hp), lambda tb: (tb, 0, 0)),   # per-step output
                pl.BlockSpec((Bp, Hp), lambda tb: (0, 0)),          # final h
                pl.BlockSpec((Bp, Hp), lambda tb: (0, 0)),          # final c
            ],
            scratch_shapes=[
                pltpu.VMEM((Bp, Hp), jnp.float32),                  # h carry
                pltpu.VMEM((Bp, Hp), jnp.float32),                  # c carry
            ],
        ),
        compiler_params=pltpu.CompilerParams(
            dimension_semantics=("arbitrary",),       # time is inherently serial
            vmem_limit_bytes=vmem_limit,
        ),
    )(gx, w_hh_p, h0_p, c0_p)

    return out_p[:S], hN, cN


# -----------------------------------------------------------------------------
# Module wrapper (parameter prep, padding, layer stacking).
# -----------------------------------------------------------------------------
class AnalogRNNPallas:
    """JAX/Pallas equivalent of AnalogRNN(AnalogLSTMCell, ...) forward.

    bias=True, batch_first=False, bidir=False, dropout=0.0 (eval), proj_size=0.
    Weights initialized like AnalogRNN.reset_parameters(xavier=False):
    uniform(-1/sqrt(hidden), 1/sqrt(hidden)) for all weights and biases.
    """

    def __init__(self, input_size, hidden_size, num_layers=1, key=None,
                 dtype=jnp.float32, t_block=16):
        self.input_size = input_size
        self.hidden_size = hidden_size
        self.num_layers = num_layers
        self.dtype = dtype
        self.t_block = t_block
        self.hidden_pad = _round_up(hidden_size, 128)   # lane-aligned gate width
        # sublane count depends on element width (8 for f32, 16 for bf16, ...)
        self.sublane = max(8, 32 // jnp.dtype(dtype).itemsize)

        if key is None:
            key = jax.random.PRNGKey(0)
        stdv = 1.0 / math.sqrt(hidden_size)
        H, Hp = hidden_size, self.hidden_pad

        def gate_pad_cols(w_t):
            # (rows, 4H) -> (rows, 4Hp): gate g occupies lanes [g*Hp, g*Hp+H)
            rows = w_t.shape[0]
            out = jnp.zeros((rows, 4 * Hp), w_t.dtype)
            for g in range(4):
                out = out.at[:, g * Hp:g * Hp + H].set(w_t[:, g * H:(g + 1) * H])
            return out

        self.params = []
        for layer in range(num_layers):
            in_feats = input_size if layer == 0 else hidden_size
            in_pad = input_size if layer == 0 else Hp    # layer>0 consumes padded acts
            key, k1, k2, k3, k4 = jax.random.split(key, 5)
            w_ih = jax.random.uniform(k1, (4 * H, in_feats), dtype, -stdv, stdv)
            w_hh = jax.random.uniform(k2, (4 * H, H), dtype, -stdv, stdv)
            b_ih = jax.random.uniform(k3, (4 * H,), dtype, -stdv, stdv)
            b_hh = jax.random.uniform(k4, (4 * H,), dtype, -stdv, stdv)

            w_ih_t = jnp.asarray(w_ih.T)                 # (in, 4H)
            w_hh_t = jnp.asarray(w_hh.T)                 # (H, 4H)
            bias = jnp.asarray(b_ih + b_hh)              # (4H,)

            # Padded, gate-major, lane-aligned variants used by the kernels.
            w_ih_p = jnp.zeros((in_pad, 4 * Hp), dtype).at[:in_feats, :].set(
                gate_pad_cols(w_ih_t))
            w_hh_p = jnp.zeros((Hp, 4 * Hp), dtype).at[:H, :].set(
                gate_pad_cols(w_hh_t))
            bias_p = jnp.zeros((4 * Hp,), dtype)
            for g in range(4):
                bias_p = bias_p.at[g * Hp:g * Hp + H].set(bias[g * H:(g + 1) * H])

            self.params.append(dict(
                w_ih_t=w_ih_t, w_hh_t=w_hh_t, bias=bias,          # reference copies
                w_ih_p=w_ih_p, w_hh_p=w_hh_p, bias_p=bias_p,       # kernel copies
            ))

    def get_zero_state(self, batch_size):
        z = jnp.zeros((batch_size, self.hidden_size), self.dtype)
        return [(z, z) for _ in range(self.num_layers)]

    def __call__(self, inp, states=None):
        # inp: (seq, batch, input_size); 2-D inputs get a batch dim, like PyTorch.
        if inp.ndim == 2:
            inp = inp[:, None, :]
        if inp.ndim != 3:
            raise RuntimeError("RNN: Expected input to be 2D or 3D")
        if inp.shape[-1] != self.input_size:
            raise RuntimeError("input.size(-1) must be equal to input_size")
        S, B, _ = inp.shape
        if states is None:
            states = self.get_zero_state(B)
        if len(states) != self.num_layers:
            raise RuntimeError(f"Expecting {self.num_layers} states")

        H, Hp = self.hidden_size, self.hidden_pad
        Bp = _round_up(B, self.sublane)

        x = jnp.pad(inp, ((0, 0), (0, Bp - B), (0, 0)))            # pad batch
        out_states = []
        for layer in range(self.num_layers):
            p = self.params[layer]
            h0, c0 = states[layer]
            h0_p = jnp.pad(h0, ((0, Bp - B), (0, Hp - H)))
            c0_p = jnp.pad(c0, ((0, Bp - B), (0, Hp - H)))
            x, hN, cN = _lstm_layer_forward(
                x, p["w_ih_p"], p["w_hh_p"], p["bias_p"], h0_p, c0_p,
                t_block=self.t_block)
            out_states.append((hN[:B, :H], cN[:B, :H]))
            # TODO(synk): inter-layer dropout not applied (dropout=0.0 / eval mode).
        output = x[:, :B, :H]
        return output, out_states


# -----------------------------------------------------------------------------
# Pure-JAX reference (lax.scan over the original, unpadded parameters).
# -----------------------------------------------------------------------------
def _reference_lstm(model, inp, states):
    output = inp
    H = model.hidden_size
    finals = []
    for layer in range(model.num_layers):
        p = model.params[layer]

        def step(carry, x_t, p=p):
            h, c = carry
            gates = x_t @ p["w_ih_t"] + h @ p["w_hh_t"] + p["bias"][None, :]
            i_g = jax.nn.sigmoid(gates[:, 0 * H:1 * H])
            f_g = jax.nn.sigmoid(gates[:, 1 * H:2 * H])
            g_g = jnp.tanh(gates[:, 2 * H:3 * H])
            o_g = jax.nn.sigmoid(gates[:, 3 * H:4 * H])
            c_new = f_g * c + i_g * g_g
            h_new = o_g * jnp.tanh(c_new)
            return (h_new, c_new), h_new

        (hN, cN), ys = jax.lax.scan(step, states[layer], output)
        finals.append((hN, cN))
        output = ys
    return output, finals


if __name__ == "__main__":
    # Small deterministic example. t_block=4 with seq_len=10 exercises multiple
    # grid blocks AND the ragged (masked) trailing block.
    seq_len, batch, input_size, hidden_size, num_layers = 10, 2, 16, 32, 2

    key = jax.random.PRNGKey(0)
    k_in, k_model = jax.random.split(key)
    inp = jax.random.normal(k_in, (seq_len, batch, input_size), jnp.float32)

    model = AnalogRNNPallas(input_size, hidden_size, num_layers,
                            key=k_model, t_block=4)

    out, out_states = model(inp)                       # states=None -> zero state
    out = jax.block_until_ready(out)
    for h, c in out_states:
        jax.block_until_ready(h)
        jax.block_until_ready(c)

    # Correctness check against a pure-JAX reference.
    ref_out, ref_states = _reference_lstm(model, inp, model.get_zero_state(batch))
    assert out.shape == (seq_len, batch, hidden_size)
    assert jnp.allclose(out, ref_out, atol=1e-4, rtol=1e-4)
    for (h, c), (rh, rc) in zip(out_states, ref_states):
        assert jnp.allclose(h, rh, atol=1e-4, rtol=1e-4)
        assert jnp.allclose(c, rc, atol=1e-4, rtol=1e-4)

    print("KERNEL_OK")
</pallas_src>

<mosaic_0001>
module attributes {stable_mosaic.version = 11 : i64} {
  func.func @_lstm_block_kernel(%arg0: i32, %arg1: memref<4x8x512xf32, #tpu.memory_space<vmem>>, %arg2: memref<128x512xf32, #tpu.memory_space<vmem>>, %arg3: memref<8x128xf32, #tpu.memory_space<vmem>>, %arg4: memref<8x128xf32, #tpu.memory_space<vmem>>, %arg5: memref<4x8x128xf32, #tpu.memory_space<vmem>>, %arg6: memref<8x128xf32, #tpu.memory_space<vmem>>, %arg7: memref<8x128xf32, #tpu.memory_space<vmem>>, %arg8: memref<8x128xf32, #tpu.memory_space<vmem>>, %arg9: memref<8x128xf32, #tpu.memory_space<vmem>>) attributes {dimension_semantics = [#tpu.dimension_semantics<arbitrary>], iteration_bounds = array<i64: 3>, scalar_prefetch = 0 : i64, scratch_operands = 2 : i64, tpu.core_type = #tpu.core_type<tc>, window_params = [{transform_indices = @transform_0, window_bounds = array<i64: 4, 8, 512>}, {pipeline_mode = #tpu.pipeline_mode<synchronous>, transform_indices = @transform_1, window_bounds = array<i64: 128, 512>}, {pipeline_mode = #tpu.pipeline_mode<synchronous>, transform_indices = @transform_2, window_bounds = array<i64: 8, 128>}, {pipeline_mode = #tpu.pipeline_mode<synchronous>, transform_indices = @transform_3, window_bounds = array<i64: 8, 128>}, {transform_indices = @transform_4, window_bounds = array<i64: 4, 8, 128>}, {pipeline_mode = #tpu.pipeline_mode<synchronous>, transform_indices = @transform_5, window_bounds = array<i64: 8, 128>}, {pipeline_mode = #tpu.pipeline_mode<synchronous>, transform_indices = @transform_6, window_bounds = array<i64: 8, 128>}]} {
    %c0_i32 = arith.constant 0 : i32
    %0 = arith.cmpi eq, %arg0, %c0_i32 : i32
    %1 = arith.extui %0 : i1 to i32
    %c0_i32_0 = arith.constant 0 : i32
    %2 = arith.cmpi ne, %1, %c0_i32_0 : i32
    scf.if %2 {
      %c0_51 = arith.constant 0 : index
      %c0_52 = arith.constant 0 : index
      %167 = vector.load %arg3[%c0_51, %c0_52] : memref<8x128xf32, #tpu.memory_space<vmem>>, vector<8x128xf32>
      %c0_53 = arith.constant 0 : index
      %c0_54 = arith.constant 0 : index
      %168 = vector.load %arg8[%c0_53, %c0_54] : memref<8x128xf32, #tpu.memory_space<vmem>>, vector<8x128xf32>
      tpu.vector_store %arg8[%c0_53, %c0_54], %167 {strides = array<i32>} : memref<8x128xf32, #tpu.memory_space<vmem>>, vector<8x128xf32>,
      %c0_55 = arith.constant 0 : index
      %c0_56 = arith.constant 0 : index
      %169 = vector.load %arg4[%c0_55, %c0_56] : memref<8x128xf32, #tpu.memory_space<vmem>>, vector<8x128xf32>
      %c0_57 = arith.constant 0 : index
      %c0_58 = arith.constant 0 : index
      %170 = vector.load %arg9[%c0_57, %c0_58] : memref<8x128xf32, #tpu.memory_space<vmem>>, vector<8x128xf32>
      tpu.vector_store %arg9[%c0_57, %c0_58], %169 {strides = array<i32>} : memref<8x128xf32, #tpu.memory_space<vmem>>, vector<8x128xf32>,
    } else {
    }
    %c0 = arith.constant 0 : index
    %c0_1 = arith.constant 0 : index
    %3 = vector.load %arg2[%c0, %c0_1] : memref<128x512xf32, #tpu.memory_space<vmem>>, vector<128x512xf32>
    %c0_2 = arith.constant 0 : index
    %c0_3 = arith.constant 0 : index
    %4 = vector.load %arg8[%c0_2, %c0_3] : memref<8x128xf32, #tpu.memory_space<vmem>>, vector<8x128xf32>
    %c0_4 = arith.constant 0 : index
    %c0_5 = arith.constant 0 : index
    %5 = vector.load %arg9[%c0_4, %c0_5] : memref<8x128xf32, #tpu.memory_space<vmem>>, vector<8x128xf32>
    %c0_i32_6 = arith.constant 0 : i32
    %6 = arith.index_cast %c0_i32_6 : i32 to index
    %c0_7 = arith.constant 0 : index
    %c0_8 = arith.constant 0 : index
    %7 = vector.load %arg1[%6, %c0_7, %c0_8] : memref<4x8x512xf32, #tpu.memory_space<vmem>>, vector<1x8x512xf32>
    %8 = vector.shape_cast %7 : vector<1x8x512xf32> to vector<8x512xf32>
    %cst = arith.constant dense<0.000000e+00> : vector<8x512xf32>
    %9 = tpu.matmul %4, %3, %cst {dimension_numbers = #tpu.dot_dimension_numbers<[1], [0], [0], [1], [0, 0, 1, 1], [], []>} : vector<8x128xf32>, vector<128x512xf32>, vector<8x512xf32> -> vector<8x512xf32>
    %10 = arith.addf %8, %9 : vector<8x512xf32>
    %11 = vector.extract_strided_slice %10 {offsets = [0, 0], sizes = [8, 128], strides = [1, 1]} : vector<8x512xf32> to vector<8x128xf32>
    %12 = arith.negf %11 : vector<8x128xf32>
    %13 = math.exp %12 : vector<8x128xf32>
    %cst_9 = arith.constant 1.000000e+00 : f32
    %14 = vector.broadcast %cst_9 : f32 to vector<8x128xf32>
    %15 = arith.addf %14, %13 : vector<8x128xf32>
    %16 = arith.divf %14, %15 : vector<8x128xf32>
    %17 = vector.extract_strided_slice %10 {offsets = [0, 128], sizes = [8, 128], strides = [1, 1]} : vector<8x512xf32> to vector<8x128xf32>
    %18 = arith.negf %17 : vector<8x128xf32>
    %19 = math.exp %18 : vector<8x128xf32>
    %cst_10 = arith.constant 1.000000e+00 : f32
    %20 = vector.broadcast %cst_10 : f32 to vector<8x128xf32>
    %21 = arith.addf %20, %19 : vector<8x128xf32>
    %22 = arith.divf %20, %21 : vector<8x128xf32>
    %23 = vector.extract_strided_slice %10 {offsets = [0, 256], sizes = [8, 128], strides = [1, 1]} : vector<8x512xf32> to vector<8x128xf32>
    %24 = math.tanh %23 : vector<8x128xf32>
    %25 = vector.extract_strided_slice %10 {offsets = [0, 384], sizes = [8, 128], strides = [1, 1]} : vector<8x512xf32> to vector<8x128xf32>
    %26 = arith.negf %25 : vector<8x128xf32>
    %27 = math.exp %26 : vector<8x128xf32>
    %cst_11 = arith.constant 1.000000e+00 : f32
    %28 = vector.broadcast %cst_11 : f32 to vector<8x128xf32>
    %29 = arith.addf %28, %27 : vector<8x128xf32>
    %30 = arith.divf %28, %29 : vector<8x128xf32>
    %31 = arith.mulf %22, %5 : vector<8x128xf32>
    %32 = arith.mulf %16, %24 : vector<8x128xf32>
    %33 = arith.addf %31, %32 : vector<8x128xf32>
    %34 = math.tanh %33 : vector<8x128xf32>
    %35 = arith.mulf %30, %34 : vector<8x128xf32>
    %c4_i32 = arith.constant 4 : i32
    %36 = arith.muli %arg0, %c4_i32 : i32
    %37 = arith.addi %36, %c0_i32_6 : i32
    %c10_i32 = arith.constant 10 : i32
    %38 = arith.cmpi slt, %37, %c10_i32 : i32
    %39 = arith.select %38, %35, %4 : vector<8x128xf32>
    %40 = arith.select %38, %33, %5 : vector<8x128xf32>
    %41 = arith.index_cast %c0_i32_6 : i32 to index
    %c0_12 = arith.constant 0 : index
    %c0_13 = arith.constant 0 : index
    %42 = vector.load %arg5[%41, %c0_12, %c0_13] : memref<4x8x128xf32, #tpu.memory_space<vmem>>, vector<1x8x128xf32>
    %43 = vector.shape_cast %42 : vector<1x8x128xf32> to vector<8x128xf32>
    %44 = vector.shape_cast %39 : vector<8x128xf32> to vector<1x8x128xf32>
    tpu.vector_store %arg5[%41, %c0_12, %c0_13], %44 {strides = array<i32>} : memref<4x8x128xf32, #tpu.memory_space<vmem>>, vector<1x8x128xf32>,
    %c1_i32 = arith.constant 1 : i32
    %45 = arith.index_cast %c1_i32 : i32 to index
    %c0_14 = arith.constant 0 : index
    %c0_15 = arith.constant 0 : index
    %46 = vector.load %arg1[%45, %c0_14, %c0_15] : memref<4x8x512xf32, #tpu.memory_space<vmem>>, vector<1x8x512xf32>
    %47 = vector.shape_cast %46 : vector<1x8x512xf32> to vector<8x512xf32>
    %cst_16 = arith.constant dense<0.000000e+00> : vector<8x512xf32>
    %48 = tpu.matmul %39, %3, %cst_16 {dimension_numbers = #tpu.dot_dimension_numbers<[1], [0], [0], [1], [0, 0, 1, 1], [], []>} : vector<8x128xf32>, vector<128x512xf32>, vector<8x512xf32> -> vector<8x512xf32>
    %49 = arith.addf %47, %48 : vector<8x512xf32>
    %50 = vector.extract_strided_slice %49 {offsets = [0, 0], sizes = [8, 128], strides = [1, 1]} : vector<8x512xf32> to vector<8x128xf32>
    %51 = arith.negf %50 : vector<8x128xf32>
    %52 = math.exp %51 : vector<8x128xf32>
    %cst_17 = arith.constant 1.000000e+00 : f32
    %53 = vector.broadcast %cst_17 : f32 to vector<8x128xf32>
    %54 = arith.addf %53, %52 : vector<8x128xf32>
    %55 = arith.divf %53, %54 : vector<8x128xf32>
    %56 = vector.extract_strided_slice %49 {offsets = [0, 128], sizes = [8, 128], strides = [1, 1]} : vector<8x512xf32> to vector<8x128xf32>
    %57 = arith.negf %56 : vector<8x128xf32>
    %58 = math.exp %57 : vector<8x128xf32>
    %cst_18 = arith.constant 1.000000e+00 : f32
    %59 = vector.broadcast %cst_18 : f32 to vector<8x128xf32>
    %60 = arith.addf %59, %58 : vector<8x128xf32>
    %61 = arith.divf %59, %60 : vector<8x128xf32>
    %62 = vector.extract_strided_slice %49 {offsets = [0, 256], sizes = [8, 128], strides = [1, 1]} : vector<8x512xf32> to vector<8x128xf32>
    %63 = math.tanh %62 : vector<8x128xf32>
    %64 = vector.extract_strided_slice %49 {offsets = [0, 384], sizes = [8, 128], strides = [1, 1]} : vector<8x512xf32> to vector<8x128xf32>
    %65 = arith.negf %64 : vector<8x128xf32>
    %66 = math.exp %65 : vector<8x128xf32>
    %cst_19 = arith.constant 1.000000e+00 : f32
    %67 = vector.broadcast %cst_19 : f32 to vector<8x128xf32>
    %68 = arith.addf %67, %66 : vector<8x128xf32>
    %69 = arith.divf %67, %68 : vector<8x128xf32>
    %70 = arith.mulf %61, %40 : vector<8x128xf32>
    %71 = arith.mulf %55, %63 : vector<8x128xf32>
    %72 = arith.addf %70, %71 : vector<8x128xf32>
    %73 = math.tanh %72 : vector<8x128xf32>
    %74 = arith.mulf %69, %73 : vector<8x128xf32>
    %c4_i32_20 = arith.constant 4 : i32
    %75 = arith.muli %arg0, %c4_i32_20 : i32
    %76 = arith.addi %75, %c1_i32 : i32
    %c10_i32_21 = arith.constant 10 : i32
    %77 = arith.cmpi slt, %76, %c10_i32_21 : i32
    %78 = arith.select %77, %74, %39 : vector<8x128xf32>
    %79 = arith.select %77, %72, %40 : vector<8x128xf32>
    %80 = arith.index_cast %c1_i32 : i32 to index
    %c0_22 = arith.constant 0 : index
    %c0_23 = arith.constant 0 : index
    %81 = vector.load %arg5[%80, %c0_22, %c0_23] : memref<4x8x128xf32, #tpu.memory_space<vmem>>, vector<1x8x128xf32>
    %82 = vector.shape_cast %81 : vector<1x8x128xf32> to vector<8x128xf32>
    %83 = vector.shape_cast %78 : vector<8x128xf32> to vector<1x8x128xf32>
    tpu.vector_store %arg5[%80, %c0_22, %c0_23], %83 {strides = array<i32>} : memref<4x8x128xf32, #tpu.memory_space<vmem>>, vector<1x8x128xf32>,
    %c2_i32 = arith.constant 2 : i32
    %84 = arith.index_cast %c2_i32 : i32 to index
    %c0_24 = arith.constant 0 : index
    %c0_25 = arith.constant 0 : index
    %85 = vector.load %arg1[%84, %c0_24, %c0_25] : memref<4x8x512xf32, #tpu.memory_space<vmem>>, vector<1x8x512xf32>
    %86 = vector.shape_cast %85 : vector<1x8x512xf32> to vector<8x512xf32>
    %cst_26 = arith.constant dense<0.000000e+00> : vector<8x512xf32>
    %87 = tpu.matmul %78, %3, %cst_26 {dimension_numbers = #tpu.dot_dimension_numbers<[1], [0], [0], [1], [0, 0, 1, 1], [], []>} : vector<8x128xf32>, vector<128x512xf32>, vector<8x512xf32> -> vector<8x512xf32>
    %88 = arith.addf %86, %87 : vector<8x512xf32>
    %89 = vector.extract_strided_slice %88 {offsets = [0, 0], sizes = [8, 128], strides = [1, 1]} : vector<8x512xf32> to vector<8x128xf32>
    %90 = arith.negf %89 : vector<8x128xf32>
    %91 = math.exp %90 : vector<8x128xf32>
    %cst_27 = arith.constant 1.000000e+00 : f32
    %92 = vector.broadcast %cst_27 : f32 to vector<8x128xf32>
    %93 = arith.addf %92, %91 : vector<8x128xf32>
    %94 = arith.divf %92, %93 : vector<8x128xf32>
    %95 = vector.extract_strided_slice %88 {offsets = [0, 128], sizes = [8, 128], strides = [1, 1]} : vector<8x512xf32> to vector<8x128xf32>
    %96 = arith.negf %95 : vector<8x128xf32>
    %97 = math.exp %96 : vector<8x128xf32>
    %cst_28 = arith.constant 1.000000e+00 : f32
    %98 = vector.broadcast %cst_28 : f32 to vector<8x128xf32>
    %99 = arith.addf %98, %97 : vector<8x128xf32>
    %100 = arith.divf %98, %99 : vector<8x128xf32>
    %101 = vector.extract_strided_slice %88 {offsets = [0, 256], sizes = [8, 128], strides = [1, 1]} : vector<8x512xf32> to vector<8x128xf32>
    %102 = math.tanh %101 : vector<8x128xf32>
    %103 = vector.extract_strided_slice %88 {offsets = [0, 384], sizes = [8, 128], strides = [1, 1]} : vector<8x512xf32> to vector<8x128xf32>
    %104 = arith.negf %103 : vector<8x128xf32>
    %105 = math.exp %104 : vector<8x128xf32>
    %cst_29 = arith.constant 1.000000e+00 : f32
    %106 = vector.broadcast %cst_29 : f32 to vector<8x128xf32>
    %107 = arith.addf %106, %105 : vector<8x128xf32>
    %108 = arith.divf %106, %107 : vector<8x128xf32>
    %109 = arith.mulf %100, %79 : vector<8x128xf32>
    %110 = arith.mulf %94, %102 : vector<8x128xf32>
    %111 = arith.addf %109, %110 : vector<8x128xf32>
    %112 = math.tanh %111 : vector<8x128xf32>
    %113 = arith.mulf %108, %112 : vector<8x128xf32>
    %c4_i32_30 = arith.constant 4 : i32
    %114 = arith.muli %arg0, %c4_i32_30 : i32
    %115 = arith.addi %114, %c2_i32 : i32
    %c10_i32_31 = arith.constant 10 : i32
    %116 = arith.cmpi slt, %115, %c10_i32_31 : i32
    %117 = arith.select %116, %113, %78 : vector<8x128xf32>
    %118 = arith.select %116, %111, %79 : vector<8x128xf32>
    %119 = arith.index_cast %c2_i32 : i32 to index
    %c0_32 = arith.constant 0 : index
    %c0_33 = arith.constant 0 : index
    %120 = vector.load %arg5[%119, %c0_32, %c0_33] : memref<4x8x128xf32, #tpu.memory_space<vmem>>, vector<1x8x128xf32>
    %121 = vector.shape_cast %120 : vector<1x8x128xf32> to vector<8x128xf32>
    %122 = vector.shape_cast %117 : vector<8x128xf32> to vector<1x8x128xf32>
    tpu.vector_store %arg5[%119, %c0_32, %c0_33], %122 {strides = array<i32>} : memref<4x8x128xf32, #tpu.memory_space<vmem>>, vector<1x8x128xf32>,
    %c3_i32 = arith.constant 3 : i32
    %123 = arith.index_cast %c3_i32 : i32 to index
    %c0_34 = arith.constant 0 : index
    %c0_35 = arith.constant 0 : index
    %124 = vector.load %arg1[%123, %c0_34, %c0_35] : memref<4x8x512xf32, #tpu.memory_space<vmem>>, vector<1x8x512xf32>
    %125 = vector.shape_cast %124 : vector<1x8x512xf32> to vector<8x512xf32>
    %cst_36 = arith.constant dense<0.000000e+00> : vector<8x512xf32>
    %126 = tpu.matmul %117, %3, %cst_36 {dimension_numbers = #tpu.dot_dimension_numbers<[1], [0], [0], [1], [0, 0, 1, 1], [], []>} : vector<8x128xf32>, vector<128x512xf32>, vector<8x512xf32> -> vector<8x512xf32>
    %127 = arith.addf %125, %126 : vector<8x512xf32>
    %128 = vector.extract_strided_slice %127 {offsets = [0, 0], sizes = [8, 128], strides = [1, 1]} : vector<8x512xf32> to vector<8x128xf32>
    %129 = arith.negf %128 : vector<8x128xf32>
    %130 = math.exp %129 : vector<8x128xf32>
    %cst_37 = arith.constant 1.000000e+00 : f32
    %131 = vector.broadcast %cst_37 : f32 to vector<8x128xf32>
    %132 = arith.addf %131, %130 : vector<8x128xf32>
    %133 = arith.divf %131, %132 : vector<8x128xf32>
    %134 = vector.extract_strided_slice %127 {offsets = [0, 128], sizes = [8, 128], strides = [1, 1]} : vector<8x512xf32> to vector<8x128xf32>
    %135 = arith.negf %134 : vector<8x128xf32>
    %136 = math.exp %135 : vector<8x128xf32>
    %cst_38 = arith.constant 1.000000e+00 : f32
    %137 = vector.broadcast %cst_38 : f32 to vector<8x128xf32>
    %138 = arith.addf %137, %136 : vector<8x128xf32>
    %139 = arith.divf %137, %138 : vector<8x128xf32>
    %140 = vector.extract_strided_slice %127 {offsets = [0, 256], sizes = [8, 128], strides = [1, 1]} : vector<8x512xf32> to vector<8x128xf32>
    %141 = math.tanh %140 : vector<8x128xf32>
    %142 = vector.extract_strided_slice %127 {offsets = [0, 384], sizes = [8, 128], strides = [1, 1]} : vector<8x512xf32> to vector<8x128xf32>
    %143 = arith.negf %142 : vector<8x128xf32>
    %144 = math.exp %143 : vector<8x128xf32>
    %cst_39 = arith.constant 1.000000e+00 : f32
    %145 = vector.broadcast %cst_39 : f32 to vector<8x128xf32>
    %146 = arith.addf %145, %144 : vector<8x128xf32>
    %147 = arith.divf %145, %146 : vector<8x128xf32>
    %148 = arith.mulf %139, %118 : vector<8x128xf32>
    %149 = arith.mulf %133, %141 : vector<8x128xf32>
    %150 = arith.addf %148, %149 : vector<8x128xf32>
    %151 = math.tanh %150 : vector<8x128xf32>
    %152 = arith.mulf %147, %151 : vector<8x128xf32>
    %c4_i32_40 = arith.constant 4 : i32
    %153 = arith.muli %arg0, %c4_i32_40 : i32
    %154 = arith.addi %153, %c3_i32 : i32
    %c10_i32_41 = arith.constant 10 : i32
    %155 = arith.cmpi slt, %154, %c10_i32_41 : i32
    %156 = arith.select %155, %152, %117 : vector<8x128xf32>
    %157 = arith.select %155, %150, %118 : vector<8x128xf32>
    %158 = arith.index_cast %c3_i32 : i32 to index
    %c0_42 = arith.constant 0 : index
    %c0_43 = arith.constant 0 : index
    %159 = vector.load %arg5[%158, %c0_42, %c0_43] : memref<4x8x128xf32, #tpu.memory_space<vmem>>, vector<1x8x128xf32>
    %160 = vector.shape_cast %159 : vector<1x8x128xf32> to vector<8x128xf32>
    %161 = vector.shape_cast %156 : vector<8x128xf32> to vector<1x8x128xf32>
    tpu.vector_store %arg5[%158, %c0_42, %c0_43], %161 {strides = array<i32>} : memref<4x8x128xf32, #tpu.memory_space<vmem>>, vector<1x8x128xf32>,
    %c4_i32_44 = arith.constant 4 : i32
    %c0_45 = arith.constant 0 : index
    %c0_46 = arith.constant 0 : index
    %162 = vector.load %arg8[%c0_45, %c0_46] : memref<8x128xf32, #tpu.memory_space<vmem>>, vector<8x128xf32>
    tpu.vector_store %arg8[%c0_45, %c0_46], %156 {strides = array<i32>} : memref<8x128xf32, #tpu.memory_space<vmem>>, vector<8x128xf32>,
    %c0_47 = arith.constant 0 : index
    %c0_48 = arith.constant 0 : index
    %163 = vector.load %arg9[%c0_47, %c0_48] : memref<8x128xf32, #tpu.memory_space<vmem>>, vector<8x128xf32>
    tpu.vector_store %arg9[%c0_47, %c0_48], %157 {strides = array<i32>} : memref<8x128xf32, #tpu.memory_space<vmem>>, vector<8x128xf32>,
    %c2_i32_49 = arith.constant 2 : i32
    %164 = arith.cmpi eq, %arg0, %c2_i32_49 : i32
    %165 = arith.extui %164 : i1 to i32
    %c0_i32_50 = arith.constant 0 : i32
    %166 = arith.cmpi ne, %165, %c0_i32_50 : i32
    scf.if %166 {
      %c0_51 = arith.constant 0 : index
      %c0_52 = arith.constant 0 : index
      %167 = vector.load %arg6[%c0_51, %c0_52] : memref<8x128xf32, #tpu.memory_space<vmem>>, vector<8x128xf32>
      tpu.vector_store %arg6[%c0_51, %c0_52], %156 {strides = array<i32>} : memref<8x128xf32, #tpu.memory_space<vmem>>, vector<8x128xf32>,
      %c0_53 = arith.constant 0 : index
      %c0_54 = arith.constant 0 : index
      %168 = vector.load %arg7[%c0_53, %c0_54] : memref<8x128xf32, #tpu.memory_space<vmem>>, vector<8x128xf32>
      tpu.vector_store %arg7[%c0_53, %c0_54], %157 {strides = array<i32>} : memref<8x128xf32, #tpu.memory_space<vmem>>, vector<8x128xf32>,
    } else {
    }
    return
  }
  func.func @transform_0(%arg0: i32) -> (i32, i32, i32) {
    %c0_i32 = arith.constant 0 : i32
    %c0_i32_0 = arith.constant 0 : i32
    %c0_i32_1 = arith.constant 0 : i32
    return %arg0, %c0_i32, %c0_i32_0 : i32, i32, i32
  }
  func.func @transform_1(%arg0: i32) -> (i32, i32) {
    %c0_i32 = arith.constant 0 : i32
    %c0_i32_0 = arith.constant 0 : i32
    %c0_i32_1 = arith.constant 0 : i32
    return %c0_i32, %c0_i32_0 : i32, i32
  }
  func.func @transform_2(%arg0: i32) -> (i32, i32) {
    %c0_i32 = arith.constant 0 : i32
    %c0_i32_0 = arith.constant 0 : i32
    %c0_i32_1 = arith.constant 0 : i32
    return %c0_i32, %c0_i32_0 : i32, i32
  }
  func.func @transform_3(%arg0: i32) -> (i32, i32) {
    %c0_i32 = arith.constant 0 : i32
    %c0_i32_0 = arith.constant 0 : i32
    %c0_i32_1 = arith.constant 0 : i32
    return %c0_i32, %c0_i32_0 : i32, i32
  }
  func.func @transform_4(%arg0: i32) -> (i32, i32, i32) {
    %c0_i32 = arith.constant 0 : i32
    %c0_i32_0 = arith.constant 0 : i32
    %c0_i32_1 = arith.constant 0 : i32
    return %arg0, %c0_i32, %c0_i32_0 : i32, i32, i32
  }
  func.func @transform_5(%arg0: i32) -> (i32, i32) {
    %c0_i32 = arith.constant 0 : i32
    %c0_i32_0 = arith.constant 0 : i32
    %c0_i32_1 = arith.constant 0 : i32
    return %c0_i32, %c0_i32_0 : i32, i32
  }
  func.func @transform_6(%arg0: i32) -> (i32, i32) {
    %c0_i32 = arith.constant 0 : i32
    %c0_i32_0 = arith.constant 0 : i32
    %c0_i32_1 = arith.constant 0 : i32
    return %c0_i32, %c0_i32_0 : i32, i32
  }
}

</mosaic_0001>

<llo_original>
// kernel: _lstm_layer_forward.1
$region0: #{_lstm_layer_forward.1}
  #allocation0 [shape = 'u32[]', space=smem, size = 0x4, offset = 0x4, fixed_abs, tag = 'smem constant byte address 0x4 - core index']
  #allocation1 [shape = 'u32[144,128]{1,0:T(1,128)}', space=vmem, size = 0x12000, scoped, tag = 'internal scratch']
  #allocation2 [shape = 'f32[8,128]{1,0:T(8,128)}', space=vmem, size = 0x1000, scoped, tag = 'scratch operand']
  #allocation3 [shape = 'f32[8,128]{1,0:T(8,128)}', space=vmem, size = 0x1000, scoped, tag = 'scratch operand']
  %s0 = inlined_call_operand.vmem [shape: f32[12,8,512], index: 0, kind: input, shape index: {}]
  %s1 = inlined_call_operand.vmem [shape: f32[128,512], index: 1, kind: input, shape index: {}]
  %s2 = inlined_call_operand.vmem [shape: f32[8,128], index: 2, kind: input, shape index: {}]
  %s3 = inlined_call_operand.vmem [shape: f32[8,128], index: 3, kind: input, shape index: {}]
  %s4 = inlined_call_operand.vmem [shape: f32[12,8,128], index: 4, kind: output, shape index: {0}]
  %s5 = inlined_call_operand.hbm [shape: f32[8,128], index: 5, kind: output, shape index: {1}]
  %s6 = inlined_call_operand.hbm [shape: f32[8,128], index: 6, kind: output, shape index: {2}]
  %7 = xla_tuple %s4, %s5, %s6
  %s8 = sld [smem:[#allocation0]]
  $region73: #{_lstm_layer_forward.1} parent=0
    _
  %s10 = ssub.s32 1, %s8
  %s11 = scalar_select 0, %s10, %s8
  $region1: #{_lstm_layer_forward.1} parent=0
    #allocation4 [shape = 'u8[4096]{0}', space=vmem, size = 0x1000, scoped, tag = 'output window, operand 1, single buffered']
    #allocation5 [shape = 's32[2]{0}', space=sflag, size = 0x8, scoped, tag = 'scoped memory for _lstm_layer_forward.1']
    #allocation6 [shape = 'u8[4096]{0}', space=vmem, size = 0x1000, scoped, tag = 'output window, operand 2, single buffered']
    #allocation7 [shape = 's32[1]{0}', space=sflag, size = 0x4, scoped, tag = 'scoped memory for _lstm_layer_forward.1']
    %12 = vsyncpa [#allocation5], 0
    %13 = vsyncpa [#allocation7], 0
    loop: start=0, step=1, limit=5
    $region2: #{_lstm_layer_forward.1} parent=1 // loop_pre_header
      _
    $region3: #{_lstm_layer_forward.1} parent=1 // loop_header
      %s15 = sphi 0, %s19
      %p16 = scmp.ge.s32.totalorder %s15, 5
      %s25 = sphi 0, %s27
      %s28 = sphi 0, %s25
      %s29 = sphi 0, %s28
      %s45 = sphi 0, %s29
      %s49 = sphi 0, %s49
      %s51 = sphi 0, %s49
      %s52 = sphi 0, %s51
      %s66 = sphi 0, %s52
      %s70 = sphi 0, %s70
      %s72 = sphi 0, %s70
      %s73 = sphi 0, %s72
      %s87 = sphi 0, %s73
      %s91 = sphi 0, %s91
      %s93 = sphi 0, %s91
      %s94 = sphi 0, %s93
      %s108 = sphi 0, %s94
      %s114 = sphi 0, %s116
      %s117 = sphi 0, %s114
      %s118 = sphi 0, %s117
      %s134 = sphi 0, %s118
      %s138 = sphi 0, %s138
      %s140 = sphi 0, %s138
      %s141 = sphi 0, %s140
      %s155 = sphi 0, %s141
      %s159 = sphi 0, %s159
      %s161 = sphi 0, %s159
      %s162 = sphi 0, %s161
      %s176 = sphi 0, %s162
    $region4: #{_lstm_layer_forward.1} parent=1 // loop_header_branch
      %18 = sbr.rel (%p16) target = $region8
    $region5: #{_lstm_layer_forward.1} parent=1 // loop_body
      %s20 = ssub.s32 %s15, 1
      %s21 = ssub.s32 %s15, 2
      %s22 = sadd.s32 %s15, 1
      %s23 = ssub.s32 %s15, %s22
      %p24 = scmp.eq.s32.totalorder %s23, 0
      %s26 = sadd.s32 %s25, 1
      %s27 = scalar_select %p24, %s25, %s26
      %p30 = pneg %p24
      %p31 = scmp.eq.s32.totalorder %s15, 2
      %p32 = por %p30, %p31
      %p33 = scmp.ne.s32.totalorder %s25, %s28
      %p34 = scmp.eq.s32.totalorder %s15, 0
      %p35 = por %p33, %p34
      %p36 = scmp.ne.s32.totalorder %s25, %s28
      %p37 = scmp.eq.s32.totalorder %s20, 2
      %p38 = por %p36, %p37
      %p39 = scmp.ne.s32.totalorder %s28, %s29
      %p40 = scmp.eq.s32.totalorder %s20, 0
      %p41 = por %p39, %p40
      %p42 = scmp.ne.s32.totalorder %s28, %s29
      %p43 = scmp.eq.s32.totalorder %s21, 2
      %p44 = por %p42, %p43
      %p46 = scmp.ne.s32.totalorder %s29, %s45
      %p47 = scmp.eq.s32.totalorder %s21, 0
      %p48 = por %p46, %p47
      %s50 = sadd.s32 %s49, 1
      %p53 = scmp.eq.s32.totalorder %s15, 2
      %p54 = scmp.ne.s32.totalorder %s49, %s51
      %p55 = scmp.eq.s32.totalorder %s15, 0
      %p56 = por %p54, %p55
      %p57 = scmp.ne.s32.totalorder %s49, %s51
      %p58 = scmp.eq.s32.totalorder %s20, 2
      %p59 = por %p57, %p58
      %p60 = scmp.ne.s32.totalorder %s51, %s52
      %p61 = scmp.eq.s32.totalorder %s20, 0
      %p62 = por %p60, %p61
      %p63 = scmp.ne.s32.totalorder %s51, %s52
      %p64 = scmp.eq.s32.totalorder %s21, 2
      %p65 = por %p63, %p64
      %p67 = scmp.ne.s32.totalorder %s52, %s66
      %p68 = scmp.eq.s32.totalorder %s21, 0
      %p69 = por %p67, %p68
      %s71 = sadd.s32 %s70, 1
      %p74 = scmp.eq.s32.totalorder %s15, 2
      %p75 = scmp.ne.s32.totalorder %s70, %s72
      %p76 = scmp.eq.s32.totalorder %s15, 0
      %p77 = por %p75, %p76
      %p78 = scmp.ne.s32.totalorder %s70, %s72
      %p79 = scmp.eq.s32.totalorder %s20, 2
      %p80 = por %p78, %p79
      %p81 = scmp.ne.s32.totalorder %s72, %s73
      %p82 = scmp.eq.s32.totalorder %s20, 0
      %p83 = por %p81, %p82
      %p84 = scmp.ne.s32.totalorder %s72, %s73
      %p85 = scmp.eq.s32.totalorder %s21, 2
      %p86 = por %p84, %p85
      %p88 = scmp.ne.s32.totalorder %s73, %s87
      %p89 = scmp.eq.s32.totalorder %s21, 0
      %p90 = por %p88, %p89
      %s92 = sadd.s32 %s91, 1
      %p95 = scmp.eq.s32.totalorder %s15, 2
      %p96 = scmp.ne.s32.totalorder %s91, %s93
      %p97 = scmp.eq.s32.totalorder %s15, 0
      %p98 = por %p96, %p97
      %p99 = scmp.ne.s32.totalorder %s91, %s93
      %p100 = scmp.eq.s32.totalorder %s20, 2
      %p101 = por %p99, %p100
      %p102 = scmp.ne.s32.totalorder %s93, %s94
      %p103 = scmp.eq.s32.totalorder %s20, 0
      %p104 = por %p102, %p103
      %p105 = scmp.ne.s32.totalorder %s93, %s94
      %p106 = scmp.eq.s32.totalorder %s21, 2
      %p107 = por %p105, %p106
      %p109 = scmp.ne.s32.totalorder %s94, %s108
      %p110 = scmp.eq.s32.totalorder %s21, 0
      %p111 = por %p109, %p110
      %s112 = ssub.s32 %s15, %s22
      %p113 = scmp.eq.s32.totalorder %s112, 0
      %s115 = sadd.s32 %s114, 1
      %s116 = scalar_select %p113, %s114, %s115
      %p119 = pneg %p113
      %p120 = scmp.eq.s32.totalorder %s15, 2
      %p121 = por %p119, %p120
      %p122 = scmp.ne.s32.totalorder %s114, %s117
      %p123 = scmp.eq.s32.totalorder %s15, 0
      %p124 = por %p122, %p123
      %p125 = scmp.ne.s32.totalorder %s114, %s117
      %p126 = scmp.eq.s32.totalorder %s20, 2
      %p127 = por %p125, %p126
      %p128 = scmp.ne.s32.totalorder %s117, %s118
      %p129 = scmp.eq.s32.totalorder %s20, 0
      %p130 = por %p128, %p129
      %p131 = scmp.ne.s32.totalorder %s117, %s118
      %p132 = scmp.eq.s32.totalorder %s21, 2
      %p133 = por %p131, %p132
      %p135 = scmp.ne.s32.totalorder %s118, %s134
      %p136 = scmp.eq.s32.totalorder %s21, 0
      %p137 = por %p135, %p136
      %s139 = sadd.s32 %s138, 1
      %p142 = scmp.eq.s32.totalorder %s15, 2
      %p143 = scmp.ne.s32.totalorder %s138, %s140
      %p144 = scmp.eq.s32.totalorder %s15, 0
      %p145 = por %p143, %p144
      %p146 = scmp.ne.s32.totalorder %s138, %s140
      %p147 = scmp.eq.s32.totalorder %s20, 2
      %p148 = por %p146, %p147
      %p149 = scmp.ne.s32.totalorder %s140, %s141
      %p150 = scmp.eq.s32.totalorder %s20, 0
      %p151 = por %p149, %p150
      %p152 = scmp.ne.s32.totalorder %s140, %s141
      %p153 = scmp.eq.s32.totalorder %s21, 2
      %p154 = por %p152, %p153
      %p156 = scmp.ne.s32.totalorder %s141, %s155
      %p157 = scmp.eq.s32.totalorder %s21, 0
      %p158 = por %p156, %p157
      %s160 = sadd.s32 %s159, 1
      %p163 = scmp.eq.s32.totalorder %s15, 2
      %p164 = scmp.ne.s32.totalorder %s159, %s161
      %p165 = scmp.eq.s32.totalorder %s15, 0
      %p166 = por %p164, %p165
      %p167 = scmp.ne.s32.totalorder %s159, %s161
      %p168 = scmp.eq.s32.totalorder %s20, 2
      %p169 = por %p167, %p168
      %p170 = scmp.ne.s32.totalorder %s161, %s162
      %p171 = scmp.eq.s32.totalorder %s20, 0
      %p172 = por %p170, %p171
      %p173 = scmp.ne.s32.totalorder %s161, %s162
      %p174 = scmp.eq.s32.totalorder %s21, 2
      %p175 = por %p173, %p174
      %p177 = scmp.ne.s32.totalorder %s162, %s176
      %p178 = scmp.eq.s32.totalorder %s21, 0
      %p179 = por %p177, %p178
      %p180 = scmp.le.s32.totalorder 1, %s15
      %p181 = scmp.lt.s32.totalorder %s15, 4
      %p182 = pnand %p180, %p181
      %p183 = pneg %p182
      // Predicated region
      $region9: #{_lstm_layer_forward.1} parent=5 // pred_check
        _
      $region10: #{_lstm_layer_forward.1} parent=5 // pred_check_branch
        %185 = sbr.rel (%p182) target = $region12
      $region11: #{_lstm_layer_forward.1} parent=5 // pred_region
        %s186 = ssub.s32 %s15, 1
        // Predicated region
        $region13: #{_lstm_layer_forward.1} parent=11 // pred_check
          %p187 = pneg %p62
        $region14: #{_lstm_layer_forward.1} parent=11 // pred_check_branch
          %189 = sbr.rel (%p187) target = $region16
        $region15: #{_lstm_layer_forward.1} parent=11 // pred_region
          _
        $region16: #{_lstm_layer_forward.1} parent=11 // pred_fallthru
          _
        // Predicated region
        $region17: #{_lstm_layer_forward.1} parent=11 // pred_check
          %p190 = pneg %p83
        $region18: #{_lstm_layer_forward.1} parent=11 // pred_check_branch
          %192 = sbr.rel (%p190) target = $region20
        $region19: #{_lstm_layer_forward.1} parent=11 // pred_region
          _
        $region20: #{_lstm_layer_forward.1} parent=11 // pred_fallthru
          _
        // Predicated region
        $region21: #{_lstm_layer_forward.1} parent=11 // pred_check
          %p193 = pneg %p104
        $region22: #{_lstm_layer_forward.1} parent=11 // pred_check_branch
          %195 = sbr.rel (%p193) target = $region24
        $region23: #{_lstm_layer_forward.1} parent=11 // pred_region
          _
        $region24: #{_lstm_layer_forward.1} parent=11 // pred_fallthru
          _
      $region12: #{_lstm_layer_forward.1} parent=5 // pred_fallthru
        _
      %p196 = scmp.lt.s32.totalorder %s15, 3
      // Predicated region
      $region25: #{_lstm_layer_forward.1} parent=5 // pred_check
        %p197 = pneg %p196
      $region26: #{_lstm_layer_forward.1} parent=5 // pred_check_branch
        %199 = sbr.rel (%p197) target = $region28
      $region27: #{_lstm_layer_forward.1} parent=5 // pred_region
        // Predicated region
        $region29: #{_lstm_layer_forward.1} parent=27 // pred_check
          %p200 = pneg %p35
        $region30: #{_lstm_layer_forward.1} parent=27 // pred_check_branch
          %202 = sbr.rel (%p200) target = $region32
        $region31: #{_lstm_layer_forward.1} parent=27 // pred_region
          %s203 = smul.u32 4, %s15
          %p204 = scmp.lt.s32.totalorder %s203, 11
          %s205 = scalar_select %p204, %s203, 11
          %s206 = smul.addr %s205, 4
          %s207 = smul.addr %s206, 8
          %s208 = scalar_lea.vmem %s0, %s207
          %s209 = smul.u32 4, %s15
        $region32: #{_lstm_layer_forward.1} parent=27 // pred_fallthru
          _
      $region28: #{_lstm_layer_forward.1} parent=5 // pred_fallthru
        _
      %p210 = scmp.le.s32.totalorder 1, %s15
      %p211 = scmp.lt.s32.totalorder %s15, 4
      %p212 = pnand %p210, %p211
      %p213 = pneg %p212
      // Predicated region
      $region33: #{_lstm_layer_forward.1} parent=5 // pred_check
        _
      $region34: #{_lstm_layer_forward.1} parent=5 // pred_check_branch
        %215 = sbr.rel (%p212) target = $region36
      $region35: #{_lstm_layer_forward.1} parent=5 // pred_region
        %s216 = ssub.s32 %s15, 1
        %s217 = smul.u32 4, %s20
        %p218 = scmp.lt.s32.totalorder %s217, 11
        %s219 = scalar_select %p218, %s217, 11
        %s220 = smul.addr %s219, 4
        %s221 = smul.addr %s220, 8
        %s222 = scalar_lea.vmem %s0, %s221
        %p223 = pneg %p41
        %p224 = pneg %p38
        %p225 = pneg %p62
        %p226 = pneg %p59
        %p227 = pneg %p83
        %p228 = pneg %p80
        %p229 = pneg %p104
        %p230 = pneg %p101
        %p231 = pneg %p130
        %p232 = pneg %p127
        %s233 = smul.u32 4, %s20
        %p234 = scmp.lt.s32.totalorder %s233, 11
        %s235 = scalar_select %p234, %s233, 11
        %s236 = smul.addr %s235, 8
        %s237 = scalar_lea.vmem %s4, %s236
        %p238 = pneg %p151
        %p239 = pneg %p148
        %p240 = pneg %p172
        %p241 = pneg %p169
        %s242 = smul.u32 4, %s20
        %p243 = scmp.lt.s32.totalorder %s242, 11
        %s244 = scalar_select %p243, %s242, 11
        %s245 = smul.addr %s244, 4
        %s246 = smul.addr %s245, 8
        %s247 = scalar_lea.vmem %s0, %s246
        %s248 = smul.u32 4, %s20
        %s249 = smul.u32 4, %s20
        %p250 = scmp.lt.s32.totalorder %s249, 11
        %s251 = scalar_select %p250, %s249, 11
        %s252 = smul.addr %s251, 8
        %s253 = scalar_lea.vmem %s4, %s252
        %s254 = smul.u32 4, %s20
        %p255 = scmp.eq.s32.totalorder %s20, 0
        // Predicated region
        $region37: #{_lstm_layer_forward.1} parent=35 // pred_check
          %p256 = pneg %p255
        $region38: #{_lstm_layer_forward.1} parent=35 // pred_check_branch
          %258 = sbr.rel (%p256) target = $region40
        $region39: #{_lstm_layer_forward.1} parent=35 // pred_region
          %v259 = vld [vmem:[%s2] sm:$0xff]
          %260 = vst [vmem:[#allocation2] sm:$0xff] %v259
          %v261 = vld [vmem:[%s3] sm:$0xff]
          %262 = vst [vmem:[#allocation3] sm:$0xff] %v261
        $region40: #{_lstm_layer_forward.1} parent=35 // pred_fallthru
          _
        %v263 = vld [vmem:[%s1] sm:$0xff]
        %v264 = vld [vmem:[%s1 + $0x8] sm:$0xff]
        %v265 = vld [vmem:[%s1 + $0x10] sm:$0xff]
        %v266 = vld [vmem:[%s1 + $0x18] sm:$0xff]
        %v267 = vld [vmem:[%s1 + $0x20] sm:$0xff]
        %v268 = vld [vmem:[%s1 + $0x28] sm:$0xff]
        %v269 = vld [vmem:[%s1 + $0x30] sm:$0xff]
        %v270 = vld [vmem:[%s1 + $0x38] sm:$0xff]
        %v271 = vld [vmem:[%s1 + $0x40] sm:$0xff]
        %v272 = vld [vmem:[%s1 + $0x48] sm:$0xff]
        %v273 = vld [vmem:[%s1 + $0x50] sm:$0xff]
        %v274 = vld [vmem:[%s1 + $0x58] sm:$0xff]
        %v275 = vld [vmem:[%s1 + $0x60] sm:$0xff]
        %v276 = vld [vmem:[%s1 + $0x68] sm:$0xff]
        %v277 = vld [vmem:[%s1 + $0x70] sm:$0xff]
        %v278 = vld [vmem:[%s1 + $0x78] sm:$0xff]
        %v279 = vld [vmem:[%s1 + $0x80] sm:$0xff]
        %v280 = vld [vmem:[%s1 + $0x88] sm:$0xff]
        %v281 = vld [vmem:[%s1 + $0x90] sm:$0xff]
        %v282 = vld [vmem:[%s1 + $0x98] sm:$0xff]
        %v283 = vld [vmem:[%s1 + $0xa0] sm:$0xff]
        %v284 = vld [vmem:[%s1 + $0xa8] sm:$0xff]
        %v285 = vld [vmem:[%s1 + $0xb0] sm:$0xff]
        %v286 = vld [vmem:[%s1 + $0xb8] sm:$0xff]
        %v287 = vld [vmem:[%s1 + $0xc0] sm:$0xff]
        %v288 = vld [vmem:[%s1 + $0xc8] sm:$0xff]
        %v289 = vld [vmem:[%s1 + $0xd0] sm:$0xff]
        %v290 = vld [vmem:[%s1 + $0xd8] sm:$0xff]
        %v291 = vld [vmem:[%s1 + $0xe0] sm:$0xff]
        %v292 = vld [vmem:[%s1 + $0xe8] sm:$0xff]
        %v293 = vld [vmem:[%s1 + $0xf0] sm:$0xff]
        %v294 = vld [vmem:[%s1 + $0xf8] sm:$0xff]
        %v295 = vld [vmem:[%s1 + $0x100] sm:$0xff]
        %v296 = vld [vmem:[%s1 + $0x108] sm:$0xff]
        %v297 = vld [vmem:[%s1 + $0x110] sm:$0xff]
        %v298 = vld [vmem:[%s1 + $0x118] sm:$0xff]
        %v299 = vld [vmem:[%s1 + $0x120] sm:$0xff]
        %v300 = vld [vmem:[%s1 + $0x128] sm:$0xff]
        %v301 = vld [vmem:[%s1 + $0x130] sm:$0xff]
        %v302 = vld [vmem:[%s1 + $0x138] sm:$0xff]
        %v303 = vld [vmem:[%s1 + $0x140] sm:$0xff]
        %v304 = vld [vmem:[%s1 + $0x148] sm:$0xff]
        %v305 = vld [vmem:[%s1 + $0x150] sm:$0xff]
        %v306 = vld [vmem:[%s1 + $0x158] sm:$0xff]
        %v307 = vld [vmem:[%s1 + $0x160] sm:$0xff]
        %v308 = vld [vmem:[%s1 + $0x168] sm:$0xff]
        %v309 = vld [vmem:[%s1 + $0x170] sm:$0xff]
        %v310 = vld [vmem:[%s1 + $0x178] sm:$0xff]
        %v311 = vld [vmem:[%s1 + $0x180] sm:$0xff]
        %v312 = vld [vmem:[%s1 + $0x188] sm:$0xff]
        %v313 = vld [vmem:[%s1 + $0x190] sm:$0xff]
        %v314 = vld [vmem:[%s1 + $0x198] sm:$0xff]
        %v315 = vld [vmem:[%s1 + $0x1a0] sm:$0xff]
        %v316 = vld [vmem:[%s1 + $0x1a8] sm:$0xff]
        %v317 = vld [vmem:[%s1 + $0x1b0] sm:$0xff]
        %v318 = vld [vmem:[%s1 + $0x1b8] sm:$0xff]
        %v319 = vld [vmem:[%s1 + $0x1c0] sm:$0xff]
        %v320 = vld [vmem:[%s1 + $0x1c8] sm:$0xff]
        %v321 = vld [vmem:[%s1 + $0x1d0] sm:$0xff]
        %v322 = vld [vmem:[%s1 + $0x1d8] sm:$0xff]
        %v323 = vld [vmem:[%s1 + $0x1e0] sm:$0xff]
        %v324 = vld [vmem:[%s1 + $0x1e8] sm:$0xff]
        %v325 = vld [vmem:[%s1 + $0x1f0] sm:$0xff]
        %v326 = vld [vmem:[%s1 + $0x1f8] sm:$0xff]
        %v327 = vld [vmem:[#allocation2] sm:$0xff]
        %v328 = vld [vmem:[#allocation3] sm:$0xff]
        %v329 = vld [vmem:[%s247] sm:$0xff]
        %v330 = vld [vmem:[%s247 + $0x8] sm:$0xff]
        %v331 = vld [vmem:[%s247 + $0x10] sm:$0xff]
        %v332 = vld [vmem:[%s247 + $0x18] sm:$0xff]
        %333 = vmatprep.subr.mxu0 %v264
        %334 = vmatpush1.msra.mxu0 %v263
        %335 = vmatprep.subr.mxu0 %v268
        %336 = vmatpush1.msra.mxu0 %v267
        %337 = vmatprep.subr.mxu0 %v272
        %338 = vmatpush1.msra.mxu0 %v271
        %339 = vmatprep.subr.mxu0 %v276
        %340 = vmatpush1.msra.mxu0 %v275
        %341 = vmatprep.subr.mxu0 %v280
        %342 = vmatpush1.msra.mxu0 %v279
        %343 = vmatprep.subr.mxu0 %v284
        %344 = vmatpush1.msra.mxu0 %v283
        %345 = vmatprep.subr.mxu0 %v288
        %346 = vmatpush1.msra.mxu0 %v287
        %347 = vmatprep.subr.mxu0 %v292
        %348 = vmatpush1.msra.mxu0 %v291
        %349 = vmatprep.subr.mxu0 %v296
        %350 = vmatpush1.msra.mxu0 %v295
        %351 = vmatprep.subr.mxu0 %v300
        %352 = vmatpush1.msra.mxu0 %v299
        %353 = vmatprep.subr.mxu0 %v304
        %354 = vmatpush1.msra.mxu0 %v303
        %355 = vmatprep.subr.mxu0 %v308
        %356 = vmatpush1.msra.mxu0 %v307
        %357 = vmatprep.subr.mxu0 %v312
        %358 = vmatpush1.msra.mxu0 %v311
        %359 = vmatprep.subr.mxu0 %v316
        %360 = vmatpush1.msra.mxu0 %v315
        %361 = vmatprep.subr.mxu0 %v320
        %362 = vmatpush1.msra.mxu0 %v319
        %363 = vmatprep.subr.mxu0 %v324
        %364 = vmatpush1.msra.mxu0 %v323
        %365 = vmatprep.subr.mxu0 0.0
        %366 = vmatpush1.msra.mxu0 0.0
        %367 = vmatprep.subr.mxu0 0.0
        %368 = vmatpush1.msra.mxu0 0.0
        %369 = vmatprep.subr.mxu0 0.0
        %370 = vmatpush1.msra.mxu0 0.0
        %371 = vmatprep.subr.mxu0 0.0
        %372 = vmatpush1.msra.mxu0 0.0
        %373 = vmatprep.subr.mxu0 0.0
        %374 = vmatpush1.msra.mxu0 0.0
        %375 = vmatprep.subr.mxu0 0.0
        %376 = vmatpush1.msra.mxu0 0.0
        %377 = vmatprep.subr.mxu0 0.0
        %378 = vmatpush1.msra.mxu0 0.0
        %379 = vmatprep.subr.mxu0 0.0
        %380 = vmatpush1.msra.mxu0 0.0
        %381 = vmatprep.subr.mxu0 0.0
        %382 = vmatpush1.msra.mxu0 0.0
        %383 = vmatprep.subr.mxu0 0.0
        %384 = vmatpush1.msra.mxu0 0.0
        %385 = vmatprep.subr.mxu0 0.0
        %386 = vmatpush1.msra.mxu0 0.0
        %387 = vmatprep.subr.mxu0 0.0
        %388 = vmatpush1.msra.mxu0 0.0
        %389 = vmatprep.subr.mxu0 0.0
        %390 = vmatpush1.msra.mxu0 0.0
        %391 = vmatprep.subr.mxu0 0.0
        %392 = vmatpush1.msra.mxu0 0.0
        %393 = vmatprep.subr.mxu0 0.0
        %394 = vmatpush1.msra.mxu0 0.0
        %395 = vmatprep.subr.mxu0 0.0
        %396 = vmatpush1.msra.mxu0 0.0
        %397 = vmatprep.mubr.f32.mxu0 0.0
        %398 = vmatmul.mubr.f32.gmra.mrb[0].mxu0 %v327
        %v399 = vpop.f32.mrb[0].mxu0
        %v400 = vadd.f32 0.0, %v399
        %v401 = vpop.f32.mrb[0].mxu0
        %v402 = vadd.f32 0.0, %v401
        %403 = vdwg.mxu0
        %404 = vmatprep.subr.mxu0 %v266
        %405 = vmatpush1.msra.mxu0 %v265
        %406 = vmatprep.subr.mxu0 %v270
        %407 = vmatpush1.msra.mxu0 %v269
        %408 = vmatprep.subr.mxu0 %v274
        %409 = vmatpush1.msra.mxu0 %v273
        %410 = vmatprep.subr.mxu0 %v278
        %411 = vmatpush1.msra.mxu0 %v277
        %412 = vmatprep.subr.mxu0 %v282
        %413 = vmatpush1.msra.mxu0 %v281
        %414 = vmatprep.subr.mxu0 %v286
        %415 = vmatpush1.msra.mxu0 %v285
        %416 = vmatprep.subr.mxu0 %v290
        %417 = vmatpush1.msra.mxu0 %v289
        %418 = vmatprep.subr.mxu0 %v294
        %419 = vmatpush1.msra.mxu0 %v293
        %420 = vmatprep.subr.mxu0 %v298
        %421 = vmatpush1.msra.mxu0 %v297
        %422 = vmatprep.subr.mxu0 %v302
        %423 = vmatpush1.msra.mxu0 %v301
        %424 = vmatprep.subr.mxu0 %v306
        %425 = vmatpush1.msra.mxu0 %v305
        %426 = vmatprep.subr.mxu0 %v310
        %427 = vmatpush1.msra.mxu0 %v309
        %428 = vmatprep.subr.mxu0 %v314
        %429 = vmatpush1.msra.mxu0 %v313
        %430 = vmatprep.subr.mxu0 %v318
        %431 = vmatpush1.msra.mxu0 %v317
        %432 = vmatprep.subr.mxu0 %v322
        %433 = vmatpush1.msra.mxu0 %v321
        %434 = vmatprep.subr.mxu0 %v326
        %435 = vmatpush1.msra.mxu0 %v325
        %436 = vmatprep.subr.mxu0 0.0
        %437 = vmatpush1.msra.mxu0 0.0
        %438 = vmatprep.subr.mxu0 0.0
        %439 = vmatpush1.msra.mxu0 0.0
        %440 = vmatprep.subr.mxu0 0.0
        %441 = vmatpush1.msra.mxu0 0.0
        %442 = vmatprep.subr.mxu0 0.0
        %443 = vmatpush1.msra.mxu0 0.0
        %444 = vmatprep.subr.mxu0 0.0
        %445 = vmatpush1.msra.mxu0 0.0
        %446 = vmatprep.subr.mxu0 0.0
        %447 = vmatpush1.msra.mxu0 0.0
        %448 = vmatprep.subr.mxu0 0.0
        %449 = vmatpush1.msra.mxu0 0.0
        %450 = vmatprep.subr.mxu0 0.0
        %451 = vmatpush1.msra.mxu0 0.0
        %452 = vmatprep.subr.mxu0 0.0
        %453 = vmatpush1.msra.mxu0 0.0
        %454 = vmatprep.subr.mxu0 0.0
        %455 = vmatpush1.msra.mxu0 0.0
        %456 = vmatprep.subr.mxu0 0.0
        %457 = vmatpush1.msra.mxu0 0.0
        %458 = vmatprep.subr.mxu0 0.0
        %459 = vmatpush1.msra.mxu0 0.0
        %460 = vmatprep.subr.mxu0 0.0
        %461 = vmatpush1.msra.mxu0 0.0
        %462 = vmatprep.subr.mxu0 0.0
        %463 = vmatpush1.msra.mxu0 0.0
        %464 = vmatprep.subr.mxu0 0.0
        %465 = vmatpush1.msra.mxu0 0.0
        %466 = vmatprep.subr.mxu0 0.0
        %467 = vmatpush1.msra.mxu0 0.0
        %468 = vmatprep.mubr.f32.mxu0 0.0
        %469 = vmatmul.mubr.f32.gmra.mrb[0].mxu0 %v327
        %v470 = vpop.f32.mrb[0].mxu0
        %v471 = vadd.f32 0.0, %v470
        %v472 = vpop.f32.mrb[0].mxu0
        %v473 = vadd.f32 0.0, %v472
        %474 = vdwg.mxu0
        %v475 = vadd.f32 %v329, %v400
        %v476 = vadd.f32 %v330, %v402
        %v477 = vadd.f32 %v331, %v471
        %v478 = vadd.f32 %v332, %v473
        %v479 = vxor.u32 %v475, 2147483648
        %v480 = vmul.f32 %v479, 1.442695
        %v481 = vpow.pop %v480
        %v482 = vadd.f32 %v481, 1.0
        %v483 = vrcp.pop %v482
        %v484 = vmul.f32 1.0, %v483
        %v485 = vxor.u32 %v476, 2147483648
        %v486 = vmul.f32 %v485, 1.442695
        %v487 = vpow.pop %v486
        %v488 = vadd.f32 %v487, 1.0
        %v489 = vrcp.pop %v488
        %v490 = vmul.f32 1.0, %v489
        %v491 = vtanh.pop %v477
        %v492 = vxor.u32 %v478, 2147483648
        %v493 = vmul.f32 %v492, 1.442695
        %v494 = vpow.pop %v493
        %v495 = vadd.f32 %v494, 1.0
        %v496 = vrcp.pop %v495
        %v497 = vmul.f32 1.0, %v496
        %v498 = vmul.f32 %v490, %v328
        %v499 = vmul.f32 %v484, %v491
        %v500 = vadd.f32 %v498, %v499
        %v501 = vtanh.pop %v500
        %v502 = vmul.f32 %v497, %v501
        %s503 = smul.u32 %s20, 4
        %p504 = scmp.lt.s32.totalorder %s503, 10
        %s505 = scalar_select %p504, 1, 0
        %v506 = vstv %s505
        %vm507 = vcmp.eq.s32.totalorder %v506, 1
        %v508 = vsel %vm507, %v502, %v327
        %v509 = vsel %vm507, %v500, %v328
        %510 = vst [vmem:[%s253] sm:$0xff] %v508
        %s511 = scalar_lea.vmem %s247, 32
        %v512 = vld [vmem:[%s511] sm:$0xff]
        %v513 = vld [vmem:[%s511 + $0x8] sm:$0xff]
        %v514 = vld [vmem:[%s511 + $0x10] sm:$0xff]
        %v515 = vld [vmem:[%s511 + $0x18] sm:$0xff]
        %516 = vmatprep.subr.mxu0 %v264
        %517 = vmatpush1.msra.mxu0 %v263
        %518 = vmatprep.subr.mxu0 %v268
        %519 = vmatpush1.msra.mxu0 %v267
        %520 = vmatprep.subr.mxu0 %v272
        %521 = vmatpush1.msra.mxu0 %v271
        %522 = vmatprep.subr.mxu0 %v276
        %523 = vmatpush1.msra.mxu0 %v275
        %524 = vmatprep.subr.mxu0 %v280
        %525 = vmatpush1.msra.mxu0 %v279
        %526 = vmatprep.subr.mxu0 %v284
        %527 = vmatpush1.msra.mxu0 %v283
        %528 = vmatprep.subr.mxu0 %v288
        %529 = vmatpush1.msra.mxu0 %v287
        %530 = vmatprep.subr.mxu0 %v292
        %531 = vmatpush1.msra.mxu0 %v291
        %532 = vmatprep.subr.mxu0 %v296
        %533 = vmatpush1.msra.mxu0 %v295
        %534 = vmatprep.subr.mxu0 %v300
        %535 = vmatpush1.msra.mxu0 %v299
        %536 = vmatprep.subr.mxu0 %v304
        %537 = vmatpush1.msra.mxu0 %v303
        %538 = vmatprep.subr.mxu0 %v308
        %539 = vmatpush1.msra.mxu0 %v307
        %540 = vmatprep.subr.mxu0 %v312
        %541 = vmatpush1.msra.mxu0 %v311
        %542 = vmatprep.subr.mxu0 %v316
        %543 = vmatpush1.msra.mxu0 %v315
        %544 = vmatprep.subr.mxu0 %v320
        %545 = vmatpush1.msra.mxu0 %v319
        %546 = vmatprep.subr.mxu0 %v324
        %547 = vmatpush1.msra.mxu0 %v323
        %548 = vmatprep.subr.mxu0 0.0
        %549 = vmatpush1.msra.mxu0 0.0
        %550 = vmatprep.subr.mxu0 0.0
        %551 = vmatpush1.msra.mxu0 0.0
        %552 = vmatprep.subr.mxu0 0.0
        %553 = vmatpush1.msra.mxu0 0.0
        %554 = vmatprep.subr.mxu0 0.0
        %555 = vmatpush1.msra.mxu0 0.0
        %556 = vmatprep.subr.mxu0 0.0
        %557 = vmatpush1.msra.mxu0 0.0
        %558 = vmatprep.subr.mxu0 0.0
        %559 = vmatpush1.msra.mxu0 0.0
        %560 = vmatprep.subr.mxu0 0.0
        %561 = vmatpush1.msra.mxu0 0.0
        %562 = vmatprep.subr.mxu0 0.0
        %563 = vmatpush1.msra.mxu0 0.0
        %564 = vmatprep.subr.mxu0 0.0
        %565 = vmatpush1.msra.mxu0 0.0
        %566 = vmatprep.subr.mxu0 0.0
        %567 = vmatpush1.msra.mxu0 0.0
        %568 = vmatprep.subr.mxu0 0.0
        %569 = vmatpush1.msra.mxu0 0.0
        %570 = vmatprep.subr.mxu0 0.0
        %571 = vmatpush1.msra.mxu0 0.0
        %572 = vmatprep.subr.mxu0 0.0
        %573 = vmatpush1.msra.mxu0 0.0
        %574 = vmatprep.subr.mxu0 0.0
        %575 = vmatpush1.msra.mxu0 0.0
        %576 = vmatprep.subr.mxu0 0.0
        %577 = vmatpush1.msra.mxu0 0.0
        %578 = vmatprep.subr.mxu0 0.0
        %579 = vmatpush1.msra.mxu0 0.0
        %580 = vmatprep.mubr.f32.mxu0 0.0
        %581 = vmatmul.mubr.f32.gmra.mrb[0].mxu0 %v508
        %v582 = vpop.f32.mrb[0].mxu0
        %v583 = vadd.f32 0.0, %v582
        %v584 = vpop.f32.mrb[0].mxu0
        %v585 = vadd.f32 0.0, %v584
        %586 = vdwg.mxu0
        %587 = vmatprep.subr.mxu0 %v266
        %588 = vmatpush1.msra.mxu0 %v265
        %589 = vmatprep.subr.mxu0 %v270
        %590 = vmatpush1.msra.mxu0 %v269
        %591 = vmatprep.subr.mxu0 %v274
        %592 = vmatpush1.msra.mxu0 %v273
        %593 = vmatprep.subr.mxu0 %v278
        %594 = vmatpush1.msra.mxu0 %v277
        %595 = vmatprep.subr.mxu0 %v282
        %596 = vmatpush1.msra.mxu0 %v281
        %597 = vmatprep.subr.mxu0 %v286
        %598 = vmatpush1.msra.mxu0 %v285
        %599 = vmatprep.subr.mxu0 %v290
        %600 = vmatpush1.msra.mxu0 %v289
        %601 = vmatprep.subr.mxu0 %v294
        %602 = vmatpush1.msra.mxu0 %v293
        %603 = vmatprep.subr.mxu0 %v298
        %604 = vmatpush1.msra.mxu0 %v297
        %605 = vmatprep.subr.mxu0 %v302
        %606 = vmatpush1.msra.mxu0 %v301
        %607 = vmatprep.subr.mxu0 %v306
        %608 = vmatpush1.msra.mxu0 %v305
        %609 = vmatprep.subr.mxu0 %v310
        %610 = vmatpush1.msra.mxu0 %v309
        %611 = vmatprep.subr.mxu0 %v314
        %612 = vmatpush1.msra.mxu0 %v313
        %613 = vmatprep.subr.mxu0 %v318
        %614 = vmatpush1.msra.mxu0 %v317
        %615 = vmatprep.subr.mxu0 %v322
        %616 = vmatpush1.msra.mxu0 %v321
        %617 = vmatprep.subr.mxu0 %v326
        %618 = vmatpush1.msra.mxu0 %v325
        %619 = vmatprep.subr.mxu0 0.0
        %620 = vmatpush1.msra.mxu0 0.0
        %621 = vmatprep.subr.mxu0 0.0
        %622 = vmatpush1.msra.mxu0 0.0
        %623 = vmatprep.subr.mxu0 0.0
        %624 = vmatpush1.msra.mxu0 0.0
        %625 = vmatprep.subr.mxu0 0.0
        %626 = vmatpush1.msra.mxu0 0.0
        %627 = vmatprep.subr.mxu0 0.0
        %628 = vmatpush1.msra.mxu0 0.0
        %629 = vmatprep.subr.mxu0 0.0
        %630 = vmatpush1.msra.mxu0 0.0
        %631 = vmatprep.subr.mxu0 0.0
        %632 = vmatpush1.msra.mxu0 0.0
        %633 = vmatprep.subr.mxu0 0.0
        %634 = vmatpush1.msra.mxu0 0.0
        %635 = vmatprep.subr.mxu0 0.0
        %636 = vmatpush1.msra.mxu0 0.0
        %637 = vmatprep.subr.mxu0 0.0
        %638 = vmatpush1.msra.mxu0 0.0
        %639 = vmatprep.subr.mxu0 0.0
        %640 = vmatpush1.msra.mxu0 0.0
        %641 = vmatprep.subr.mxu0 0.0
        %642 = vmatpush1.msra.mxu0 0.0
        %643 = vmatprep.subr.mxu0 0.0
        %644 = vmatpush1.msra.mxu0 0.0
        %645 = vmatprep.subr.mxu0 0.0
        %646 = vmatpush1.msra.mxu0 0.0
        %647 = vmatprep.subr.mxu0 0.0
        %648 = vmatpush1.msra.mxu0 0.0
        %649 = vmatprep.subr.mxu0 0.0
        %650 = vmatpush1.msra.mxu0 0.0
        %651 = vmatprep.mubr.f32.mxu0 0.0
        %652 = vmatmul.mubr.f32.gmra.mrb[0].mxu0 %v508
        %v653 = vpop.f32.mrb[0].mxu0
        %v654 = vadd.f32 0.0, %v653
        %v655 = vpop.f32.mrb[0].mxu0
        %v656 = vadd.f32 0.0, %v655
        %657 = vdwg.mxu0
        %v658 = vadd.f32 %v512, %v583
        %v659 = vadd.f32 %v513, %v585
        %v660 = vadd.f32 %v514, %v654
        %v661 = vadd.f32 %v515, %v656
        %v662 = vxor.u32 %v658, 2147483648
        %v663 = vmul.f32 %v662, 1.442695
        %v664 = vpow.pop %v663
        %v665 = vadd.f32 %v664, 1.0
        %v666 = vrcp.pop %v665
        %v667 = vmul.f32 1.0, %v666
        %v668 = vxor.u32 %v659, 2147483648
        %v669 = vmul.f32 %v668, 1.442695
        %v670 = vpow.pop %v669
        %v671 = vadd.f32 %v670, 1.0
        %v672 = vrcp.pop %v671
        %v673 = vmul.f32 1.0, %v672
        %v674 = vtanh.pop %v660
        %v675 = vxor.u32 %v661, 2147483648
        %v676 = vmul.f32 %v675, 1.442695
        %v677 = vpow.pop %v676
        %v678 = vadd.f32 %v677, 1.0
        %v679 = vrcp.pop %v678
        %v680 = vmul.f32 1.0, %v679
        %v681 = vmul.f32 %v673, %v509
        %v682 = vmul.f32 %v667, %v674
        %v683 = vadd.f32 %v681, %v682
        %v684 = vtanh.pop %v683
        %v685 = vmul.f32 %v680, %v684
        %s686 = sadd.s32 %s503, 1
        %p687 = scmp.lt.s32.totalorder %s686, 10
        %s688 = scalar_select %p687, 1, 0
        %v689 = vstv %s688
        %vm690 = vcmp.eq.s32.totalorder %v689, 1
        %v691 = vsel %vm690, %v685, %v508
        %v692 = vsel %vm690, %v683, %v509
        %s693 = scalar_lea.vmem %s253, 8
        %694 = vst [vmem:[%s693] sm:$0xff] %v691
        %s695 = scalar_lea.vmem %s247, 64
        %v696 = vld [vmem:[%s695] sm:$0xff]
        %v697 = vld [vmem:[%s695 + $0x8] sm:$0xff]
        %v698 = vld [vmem:[%s695 + $0x10] sm:$0xff]
        %v699 = vld [vmem:[%s695 + $0x18] sm:$0xff]
        %700 = vmatprep.subr.mxu0 %v264
        %701 = vmatpush1.msra.mxu0 %v263
        %702 = vmatprep.subr.mxu0 %v268
        %703 = vmatpush1.msra.mxu0 %v267
        %704 = vmatprep.subr.mxu0 %v272
        %705 = vmatpush1.msra.mxu0 %v271
        %706 = vmatprep.subr.mxu0 %v276
        %707 = vmatpush1.msra.mxu0 %v275
        %708 = vmatprep.subr.mxu0 %v280
        %709 = vmatpush1.msra.mxu0 %v279
        %710 = vmatprep.subr.mxu0 %v284
        %711 = vmatpush1.msra.mxu0 %v283
        %712 = vmatprep.subr.mxu0 %v288
        %713 = vmatpush1.msra.mxu0 %v287
        %714 = vmatprep.subr.mxu0 %v292
        %715 = vmatpush1.msra.mxu0 %v291
        %716 = vmatprep.subr.mxu0 %v296
        %717 = vmatpush1.msra.mxu0 %v295
        %718 = vmatprep.subr.mxu0 %v300
        %719 = vmatpush1.msra.mxu0 %v299
        %720 = vmatprep.subr.mxu0 %v304
        %721 = vmatpush1.msra.mxu0 %v303
        %722 = vmatprep.subr.mxu0 %v308
        %723 = vmatpush1.msra.mxu0 %v307
        %724 = vmatprep.subr.mxu0 %v312
        %725 = vmatpush1.msra.mxu0 %v311
        %726 = vmatprep.subr.mxu0 %v316
        %727 = vmatpush1.msra.mxu0 %v315
        %728 = vmatprep.subr.mxu0 %v320
        %729 = vmatpush1.msra.mxu0 %v319
        %730 = vmatprep.subr.mxu0 %v324
        %731 = vmatpush1.msra.mxu0 %v323
        %732 = vmatprep.subr.mxu0 0.0
        %733 = vmatpush1.msra.mxu0 0.0
        %734 = vmatprep.subr.mxu0 0.0
        %735 = vmatpush1.msra.mxu0 0.0
        %736 = vmatprep.subr.mxu0 0.0
        %737 = vmatpush1.msra.mxu0 0.0
        %738 = vmatprep.subr.mxu0 0.0
        %739 = vmatpush1.msra.mxu0 0.0
        %740 = vmatprep.subr.mxu0 0.0
        %741 = vmatpush1.msra.mxu0 0.0
        %742 = vmatprep.subr.mxu0 0.0
        %743 = vmatpush1.msra.mxu0 0.0
        %744 = vmatprep.subr.mxu0 0.0
        %745 = vmatpush1.msra.mxu0 0.0
        %746 = vmatprep.subr.mxu0 0.0
        %747 = vmatpush1.msra.mxu0 0.0
        %748 = vmatprep.subr.mxu0 0.0
        %749 = vmatpush1.msra.mxu0 0.0
        %750 = vmatprep.subr.mxu0 0.0
        %751 = vmatpush1.msra.mxu0 0.0
        %752 = vmatprep.subr.mxu0 0.0
        %753 = vmatpush1.msra.mxu0 0.0
        %754 = vmatprep.subr.mxu0 0.0
        %755 = vmatpush1.msra.mxu0 0.0
        %756 = vmatprep.subr.mxu0 0.0
        %757 = vmatpush1.msra.mxu0 0.0
        %758 = vmatprep.subr.mxu0 0.0
        %759 = vmatpush1.msra.mxu0 0.0
        %760 = vmatprep.subr.mxu0 0.0
        %761 = vmatpush1.msra.mxu0 0.0
        %762 = vmatprep.subr.mxu0 0.0
        %763 = vmatpush1.msra.mxu0 0.0
        %764 = vmatprep.mubr.f32.mxu0 0.0
        %765 = vmatmul.mubr.f32.gmra.mrb[0].mxu0 %v691
        %v766 = vpop.f32.mrb[0].mxu0
        %v767 = vadd.f32 0.0, %v766
        %v768 = vpop.f32.mrb[0].mxu0
        %v769 = vadd.f32 0.0, %v768
        %770 = vdwg.mxu0
        %771 = vmatprep.subr.mxu0 %v266
        %772 = vmatpush1.msra.mxu0 %v265
        %773 = vmatprep.subr.mxu0 %v270
        %774 = vmatpush1.msra.mxu0 %v269
        %775 = vmatprep.subr.mxu0 %v274
        %776 = vmatpush1.msra.mxu0 %v273
        %777 = vmatprep.subr.mxu0 %v278
        %778 = vmatpush1.msra.mxu0 %v277
        %779 = vmatprep.subr.mxu0 %v282
        %780 = vmatpush1.msra.mxu0 %v281
        %781 = vmatprep.subr.mxu0 %v286
        %782 = vmatpush1.msra.mxu0 %v285
        %783 = vmatprep.subr.mxu0 %v290
        %784 = vmatpush1.msra.mxu0 %v289
        %785 = vmatprep.subr.mxu0 %v294
        %786 = vmatpush1.msra.mxu0 %v293
        %787 = vmatprep.subr.mxu0 %v298
        %788 = vmatpush1.msra.mxu0 %v297
        %789 = vmatprep.subr.mxu0 %v302
        %790 = vmatpush1.msra.mxu0 %v301
        %791 = vmatprep.subr.mxu0 %v306
        %792 = vmatpush1.msra.mxu0 %v305
        %793 = vmatprep.subr.mxu0 %v310
        %794 = vmatpush1.msra.mxu0 %v309
        %795 = vmatprep.subr.mxu0 %v314
        %796 = vmatpush1.msra.mxu0 %v313
        %797 = vmatprep.subr.mxu0 %v318
        %798 = vmatpush1.msra.mxu0 %v317
        %799 = vmatprep.subr.mxu0 %v322
        %800 = vmatpush1.msra.mxu0 %v321
        %801 = vmatprep.subr.mxu0 %v326
        %802 = vmatpush1.msra.mxu0 %v325
        %803 = vmatprep.subr.mxu0 0.0
        %804 = vmatpush1.msra.mxu0 0.0
        %805 = vmatprep.subr.mxu0 0.0
        %806 = vmatpush1.msra.mxu0 0.0
        %807 = vmatprep.subr.mxu0 0.0
        %808 = vmatpush1.msra.mxu0 0.0
        %809 = vmatprep.subr.mxu0 0.0
        %810 = vmatpush1.msra.mxu0 0.0
        %811 = vmatprep.subr.mxu0 0.0
        %812 = vmatpush1.msra.mxu0 0.0
        %813 = vmatprep.subr.mxu0 0.0
        %814 = vmatpush1.msra.mxu0 0.0
        %815 = vmatprep.subr.mxu0 0.0
        %816 = vmatpush1.msra.mxu0 0.0
        %817 = vmatprep.subr.mxu0 0.0
        %818 = vmatpush1.msra.mxu0 0.0
        %819 = vmatprep.subr.mxu0 0.0
        %820 = vmatpush1.msra.mxu0 0.0
        %821 = vmatprep.subr.mxu0 0.0
        %822 = vmatpush1.msra.mxu0 0.0
        %823 = vmatprep.subr.mxu0 0.0
        %824 = vmatpush1.msra.mxu0 0.0
        %825 = vmatprep.subr.mxu0 0.0
        %826 = vmatpush1.msra.mxu0 0.0
        %827 = vmatprep.subr.mxu0 0.0
        %828 = vmatpush1.msra.mxu0 0.0
        %829 = vmatprep.subr.mxu0 0.0
        %830 = vmatpush1.msra.mxu0 0.0
        %831 = vmatprep.subr.mxu0 0.0
        %832 = vmatpush1.msra.mxu0 0.0
        %833 = vmatprep.subr.mxu0 0.0
        %834 = vmatpush1.msra.mxu0 0.0
        %835 = vmatprep.mubr.f32.mxu0 0.0
        %836 = vmatmul.mubr.f32.gmra.mrb[0].mxu0 %v691
        %v837 = vpop.f32.mrb[0].mxu0
        %v838 = vadd.f32 0.0, %v837
        %v839 = vpop.f32.mrb[0].mxu0
        %v840 = vadd.f32 0.0, %v839
        %841 = vdwg.mxu0
        %v842 = vadd.f32 %v696, %v767
        %v843 = vadd.f32 %v697, %v769
        %v844 = vadd.f32 %v698, %v838
        %v845 = vadd.f32 %v699, %v840
        %v846 = vxor.u32 %v842, 2147483648
        %v847 = vmul.f32 %v846, 1.442695
        %v848 = vpow.pop %v847
        %v849 = vadd.f32 %v848, 1.0
        %v850 = vrcp.pop %v849
        %v851 = vmul.f32 1.0, %v850
        %v852 = vxor.u32 %v843, 2147483648
        %v853 = vmul.f32 %v852, 1.442695
        %v854 = vpow.pop %v853
        %v855 = vadd.f32 %v854, 1.0
        %v856 = vrcp.pop %v855
        %v857 = vmul.f32 1.0, %v856
        %v858 = vtanh.pop %v844
        %v859 = vxor.u32 %v845, 2147483648
        %v860 = vmul.f32 %v859, 1.442695
        %v861 = vpow.pop %v860
        %v862 = vadd.f32 %v861, 1.0
        %v863 = vrcp.pop %v862
        %v864 = vmul.f32 1.0, %v863
        %v865 = vmul.f32 %v857, %v692
        %v866 = vmul.f32 %v851, %v858
        %v867 = vadd.f32 %v865, %v866
        %v868 = vtanh.pop %v867
        %v869 = vmul.f32 %v864, %v868
        %s870 = sadd.s32 %s503, 2
        %p871 = scmp.lt.s32.totalorder %s870, 10
        %s872 = scalar_select %p871, 1, 0
        %v873 = vstv %s872
        %vm874 = vcmp.eq.s32.totalorder %v873, 1
        %v875 = vsel %vm874, %v869, %v691
        %v876 = vsel %vm874, %v867, %v692
        %s877 = scalar_lea.vmem %s253, 16
        %878 = vst [vmem:[%s877] sm:$0xff] %v875
        %s879 = scalar_lea.vmem %s247, 96
        %v880 = vld [vmem:[%s879] sm:$0xff]
        %v881 = vld [vmem:[%s879 + $0x8] sm:$0xff]
        %v882 = vld [vmem:[%s879 + $0x10] sm:$0xff]
        %v883 = vld [vmem:[%s879 + $0x18] sm:$0xff]
        %884 = vmatprep.subr.mxu0 %v264
        %885 = vmatpush1.msra.mxu0 %v263
        %886 = vmatprep.subr.mxu0 %v268
        %887 = vmatpush1.msra.mxu0 %v267
        %888 = vmatprep.subr.mxu0 %v272
        %889 = vmatpush1.msra.mxu0 %v271
        %890 = vmatprep.subr.mxu0 %v276
        %891 = vmatpush1.msra.mxu0 %v275
        %892 = vmatprep.subr.mxu0 %v280
        %893 = vmatpush1.msra.mxu0 %v279
        %894 = vmatprep.subr.mxu0 %v284
        %895 = vmatpush1.msra.mxu0 %v283
        %896 = vmatprep.subr.mxu0 %v288
        %897 = vmatpush1.msra.mxu0 %v287
        %898 = vmatprep.subr.mxu0 %v292
        %899 = vmatpush1.msra.mxu0 %v291
        %900 = vmatprep.subr.mxu0 %v296
        %901 = vmatpush1.msra.mxu0 %v295
        %902 = vmatprep.subr.mxu0 %v300
        %903 = vmatpush1.msra.mxu0 %v299
        %904 = vmatprep.subr.mxu0 %v304
        %905 = vmatpush1.msra.mxu0 %v303
        %906 = vmatprep.subr.mxu0 %v308
        %907 = vmatpush1.msra.mxu0 %v307
        %908 = vmatprep.subr.mxu0 %v312
        %909 = vmatpush1.msra.mxu0 %v311
        %910 = vmatprep.subr.mxu0 %v316
        %911 = vmatpush1.msra.mxu0 %v315
        %912 = vmatprep.subr.mxu0 %v320
        %913 = vmatpush1.msra.mxu0 %v319
        %914 = vmatprep.subr.mxu0 %v324
        %915 = vmatpush1.msra.mxu0 %v323
        %916 = vmatprep.subr.mxu0 0.0
        %917 = vmatpush1.msra.mxu0 0.0
        %918 = vmatprep.subr.mxu0 0.0
        %919 = vmatpush1.msra.mxu0 0.0
        %920 = vmatprep.subr.mxu0 0.0
        %921 = vmatpush1.msra.mxu0 0.0
        %922 = vmatprep.subr.mxu0 0.0
        %923 = vmatpush1.msra.mxu0 0.0
        %924 = vmatprep.subr.mxu0 0.0
        %925 = vmatpush1.msra.mxu0 0.0
        %926 = vmatprep.subr.mxu0 0.0
        %927 = vmatpush1.msra.mxu0 0.0
        %928 = vmatprep.subr.mxu0 0.0
        %929 = vmatpush1.msra.mxu0 0.0
        %930 = vmatprep.subr.mxu0 0.0
        %931 = vmatpush1.msra.mxu0 0.0
        %932 = vmatprep.subr.mxu0 0.0
        %933 = vmatpush1.msra.mxu0 0.0
        %934 = vmatprep.subr.mxu0 0.0
        %935 = vmatpush1.msra.mxu0 0.0
        %936 = vmatprep.subr.mxu0 0.0
        %937 = vmatpush1.msra.mxu0 0.0
        %938 = vmatprep.subr.mxu0 0.0
        %939 = vmatpush1.msra.mxu0 0.0
        %940 = vmatprep.subr.mxu0 0.0
        %941 = vmatpush1.msra.mxu0 0.0
        %942 = vmatprep.subr.mxu0 0.0
        %943 = vmatpush1.msra.mxu0 0.0
        %944 = vmatprep.subr.mxu0 0.0
        %945 = vmatpush1.msra.mxu0 0.0
        %946 = vmatprep.subr.mxu0 0.0
        %947 = vmatpush1.msra.mxu0 0.0
        %948 = vmatprep.mubr.f32.mxu0 0.0
        %949 = vmatmul.mubr.f32.gmra.mrb[0].mxu0 %v875
        %v950 = vpop.f32.mrb[0].mxu0
        %v951 = vadd.f32 0.0, %v950
        %v952 = vpop.f32.mrb[0].mxu0
        %v953 = vadd.f32 0.0, %v952
        %954 = vdwg.mxu0
        %955 = vmatprep.subr.mxu0 %v266
        %956 = vmatpush1.msra.mxu0 %v265
        %957 = vmatprep.subr.mxu0 %v270
        %958 = vmatpush1.msra.mxu0 %v269
        %959 = vmatprep.subr.mxu0 %v274
        %960 = vmatpush1.msra.mxu0 %v273
        %961 = vmatprep.subr.mxu0 %v278
        %962 = vmatpush1.msra.mxu0 %v277
        %963 = vmatprep.subr.mxu0 %v282
        %964 = vmatpush1.msra.mxu0 %v281
        %965 = vmatprep.subr.mxu0 %v286
        %966 = vmatpush1.msra.mxu0 %v285
        %967 = vmatprep.subr.mxu0 %v290
        %968 = vmatpush1.msra.mxu0 %v289
        %969 = vmatprep.subr.mxu0 %v294
        %970 = vmatpush1.msra.mxu0 %v293
        %971 = vmatprep.subr.mxu0 %v298
        %972 = vmatpush1.msra.mxu0 %v297
        %973 = vmatprep.subr.mxu0 %v302
        %974 = vmatpush1.msra.mxu0 %v301
        %975 = vmatprep.subr.mxu0 %v306
        %976 = vmatpush1.msra.mxu0 %v305
        %977 = vmatprep.subr.mxu0 %v310
        %978 = vmatpush1.msra.mxu0 %v309
        %979 = vmatprep.subr.mxu0 %v314
        %980 = vmatpush1.msra.mxu0 %v313
        %981 = vmatprep.subr.mxu0 %v318
        %982 = vmatpush1.msra.mxu0 %v317
        %983 = vmatprep.subr.mxu0 %v322
        %984 = vmatpush1.msra.mxu0 %v321
        %985 = vmatprep.subr.mxu0 %v326
        %986 = vmatpush1.msra.mxu0 %v325
        %987 = vmatprep.subr.mxu0 0.0
        %988 = vmatpush1.msra.mxu0 0.0
        %989 = vmatprep.subr.mxu0 0.0
        %990 = vmatpush1.msra.mxu0 0.0
        %991 = vmatprep.subr.mxu0 0.0
        %992 = vmatpush1.msra.mxu0 0.0
        %993 = vmatprep.subr.mxu0 0.0
        %994 = vmatpush1.msra.mxu0 0.0
        %995 = vmatprep.subr.mxu0 0.0
        %996 = vmatpush1.msra.mxu0 0.0
        %997 = vmatprep.subr.mxu0 0.0
        %998 = vmatpush1.msra.mxu0 0.0
        %999 = vmatprep.subr.mxu0 0.0
        %1000 = vmatpush1.msra.mxu0 0.0
        %1001 = vmatprep.subr.mxu0 0.0
        %1002 = vmatpush1.msra.mxu0 0.0
        %1003 = vmatprep.subr.mxu0 0.0
        %1004 = vmatpush1.msra.mxu0 0.0
        %1005 = vmatprep.subr.mxu0 0.0
        %1006 = vmatpush1.msra.mxu0 0.0
        %1007 = vmatprep.subr.mxu0 0.0
        %1008 = vmatpush1.msra.mxu0 0.0
        %1009 = vmatprep.subr.mxu0 0.0
        %1010 = vmatpush1.msra.mxu0 0.0
        %1011 = vmatprep.subr.mxu0 0.0
        %1012 = vmatpush1.msra.mxu0 0.0
        %1013 = vmatprep.subr.mxu0 0.0
        %1014 = vmatpush1.msra.mxu0 0.0
        %1015 = vmatprep.subr.mxu0 0.0
        %1016 = vmatpush1.msra.mxu0 0.0
        %1017 = vmatprep.subr.mxu0 0.0
        %1018 = vmatpush1.msra.mxu0 0.0
        %1019 = vmatprep.mubr.f32.mxu0 0.0
        %1020 = vmatmul.mubr.f32.gmra.mrb[0].mxu0 %v875
        %v1021 = vpop.f32.mrb[0].mxu0
        %v1022 = vadd.f32 0.0, %v1021
        %v1023 = vpop.f32.mrb[0].mxu0
        %v1024 = vadd.f32 0.0, %v1023
        %1025 = vdwg.mxu0
        %v1026 = vadd.f32 %v880, %v951
        %v1027 = vadd.f32 %v881, %v953
        %v1028 = vadd.f32 %v882, %v1022
        %v1029 = vadd.f32 %v883, %v1024
        %v1030 = vxor.u32 %v1026, 2147483648
        %v1031 = vmul.f32 %v1030, 1.442695
        %v1032 = vpow.pop %v1031
        %v1033 = vadd.f32 %v1032, 1.0
        %v1034 = vrcp.pop %v1033
        %v1035 = vmul.f32 1.0, %v1034
        %v1036 = vxor.u32 %v1027, 2147483648
        %v1037 = vmul.f32 %v1036, 1.442695
        %v1038 = vpow.pop %v1037
        %v1039 = vadd.f32 %v1038, 1.0
        %v1040 = vrcp.pop %v1039
        %v1041 = vmul.f32 1.0, %v1040
        %v1042 = vtanh.pop %v1028
        %v1043 = vxor.u32 %v1029, 2147483648
        %v1044 = vmul.f32 %v1043, 1.442695
        %v1045 = vpow.pop %v1044
        %v1046 = vadd.f32 %v1045, 1.0
        %v1047 = vrcp.pop %v1046
        %v1048 = vmul.f32 1.0, %v1047
        %v1049 = vmul.f32 %v1041, %v876
        %v1050 = vmul.f32 %v1035, %v1042
        %v1051 = vadd.f32 %v1049, %v1050
        %v1052 = vtanh.pop %v1051
        %v1053 = vmul.f32 %v1048, %v1052
        %s1054 = sadd.s32 %s503, 3
        %p1055 = scmp.lt.s32.totalorder %s1054, 10
        %s1056 = scalar_select %p1055, 1, 0
        %v1057 = vstv %s1056
        %vm1058 = vcmp.eq.s32.totalorder %v1057, 1
        %v1059 = vsel %vm1058, %v1053, %v875
        %v1060 = vsel %vm1058, %v1051, %v876
        %s1061 = scalar_lea.vmem %s253, 24
        %1062 = vst [vmem:[%s1061] sm:$0xff] %v1059
        %1063 = vst [vmem:[#allocation2] sm:$0xff] %v1059
        %1064 = vst [vmem:[#allocation3] sm:$0xff] %v1060
        %p1065 = scmp.eq.s32.totalorder %s20, 2
        // Predicated region
        $region41: #{_lstm_layer_forward.1} parent=35 // pred_check
          %p1066 = pneg %p1065
        $region42: #{_lstm_layer_forward.1} parent=35 // pred_check_branch
          %1068 = sbr.rel (%p1066) target = $region44
        $region43: #{_lstm_layer_forward.1} parent=35 // pred_region
          %1069 = vst [vmem:[#allocation4] sm:$0xff] %v1059
          %1070 = vst [vmem:[#allocation6] sm:$0xff] %v1060
        $region44: #{_lstm_layer_forward.1} parent=35 // pred_fallthru
          _
        %s1071 = smul.u32 4, %s20
        %p1072 = scmp.lt.s32.totalorder %s1071, 11
        %s1073 = scalar_select %p1072, %s1071, 11
        %s1074 = smul.addr %s1073, 8
        %s1075 = scalar_lea.vmem %s4, %s1074
        // Predicated region
        $region45: #{_lstm_layer_forward.1} parent=35 // pred_check
          %p1076 = pneg %p127
        $region46: #{_lstm_layer_forward.1} parent=35 // pred_check_branch
          %1078 = sbr.rel (%p1076) target = $region48
        $region47: #{_lstm_layer_forward.1} parent=35 // pred_region
          %s1079 = smul.u32 4, %s20
        $region48: #{_lstm_layer_forward.1} parent=35 // pred_fallthru
          _
        // Predicated region
        $region49: #{_lstm_layer_forward.1} parent=35 // pred_check
          %p1080 = pneg %p148
        $region50: #{_lstm_layer_forward.1} parent=35 // pred_check_branch
          %1082 = sbr.rel (%p1080) target = $region52
        $region51: #{_lstm_layer_forward.1} parent=35 // pred_region
          %s1084 = ssub.s32 128, 128
          %1085 = vsyncadd [#allocation5], %s1084
          %s1087 = sshll.u32 [#allocation4], 4
          %s1088 = int_to_ptr.vmem [resolvable:$true] %s1087
          %1090 = dma.vmem_to_hbm [thread:$0]  %s1088, 128, %s5, [#allocation5]
        $region52: #{_lstm_layer_forward.1} parent=35 // pred_fallthru
          _
        // Predicated region
        $region53: #{_lstm_layer_forward.1} parent=35 // pred_check
          %p1091 = pneg %p169
        $region54: #{_lstm_layer_forward.1} parent=35 // pred_check_branch
          %1093 = sbr.rel (%p1091) target = $region56
        $region55: #{_lstm_layer_forward.1} parent=35 // pred_region
          %s1095 = ssub.s32 128, 128
          %1096 = vsyncadd [#allocation7], %s1095
          %s1098 = sshll.u32 [#allocation6], 4
          %s1099 = int_to_ptr.vmem [resolvable:$true] %s1098
          %1101 = dma.vmem_to_hbm [thread:$0]  %s1099, 128, %s6, [#allocation7]
        $region56: #{_lstm_layer_forward.1} parent=35 // pred_fallthru
          _
        // Predicated region
        $region57: #{_lstm_layer_forward.1} parent=35 // pred_check
          %p1102 = pneg %p148
        $region58: #{_lstm_layer_forward.1} parent=35 // pred_check_branch
          %1104 = sbr.rel (%p1102) target = $region60
        $region59: #{_lstm_layer_forward.1} parent=35 // pred_region
          %1105 = dma.done [#allocation5], 128
        $region60: #{_lstm_layer_forward.1} parent=35 // pred_fallthru
          _
        // Predicated region
        $region61: #{_lstm_layer_forward.1} parent=35 // pred_check
          %p1106 = pneg %p169
        $region62: #{_lstm_layer_forward.1} parent=35 // pred_check_branch
          %1108 = sbr.rel (%p1106) target = $region64
        $region63: #{_lstm_layer_forward.1} parent=35 // pred_region
          %1109 = dma.done [#allocation7], 128
        $region64: #{_lstm_layer_forward.1} parent=35 // pred_fallthru
          _
      $region36: #{_lstm_layer_forward.1} parent=5 // pred_fallthru
        _
      %p1110 = scmp.le.s32.totalorder 2, %s15
      // Predicated region
      $region65: #{_lstm_layer_forward.1} parent=5 // pred_check
        %p1111 = pneg %p1110
      $region66: #{_lstm_layer_forward.1} parent=5 // pred_check_branch
        %1113 = sbr.rel (%p1111) target = $region68
      $region67: #{_lstm_layer_forward.1} parent=5 // pred_region
        %s1114 = ssub.s32 %s15, 2
        // Predicated region
        $region69: #{_lstm_layer_forward.1} parent=67 // pred_check
          %p1115 = pneg %p133
        $region70: #{_lstm_layer_forward.1} parent=67 // pred_check_branch
          %1117 = sbr.rel (%p1115) target = $region72
        $region71: #{_lstm_layer_forward.1} parent=67 // pred_region
          %s1118 = smul.u32 4, %s21
          %p1119 = scmp.lt.s32.totalorder %s1118, 11
          %s1120 = scalar_select %p1119, %s1118, 11
          %s1121 = smul.addr %s1120, 8
          %s1122 = scalar_lea.vmem %s4, %s1121
        $region72: #{_lstm_layer_forward.1} parent=67 // pred_fallthru
          _
      $region68: #{_lstm_layer_forward.1} parent=5 // pred_fallthru
        _
    $region6: #{_lstm_layer_forward.1} parent=1 // loop_footer
      %s19 = sadd.s32 1, %s15
    $region7: #{_lstm_layer_forward.1} parent=1 // loop_footer_branch
      %14 = sbr.rel target = $region3
    $region8: #{_lstm_layer_forward.1} parent=1 // loop_exit
      _
    %1123 = vsyncpa [#allocation5], 1
    %s1124 = scalar_lea.sflag [#allocation5], 1
    %1125 = vsyncpa %s1124, 1
    %1126 = vsyncpa [#allocation7], 1

</llo_original>
